<compile_context>
chip_gen: v7x
topology: tpu7x:2x2x1
jax: 0.10.0
libtpu: 0.0.40
codegen_flags: <defaults>
</compile_context>

<pallas_src>
import functools
import math

import jax
import jax.numpy as jnp
import numpy as np
from jax import lax
from jax.experimental import pallas as pl
from jax.experimental.pallas import tpu as pltpu

_BN_EPS = 1e-5


# ---------------------------------------------------------------------------
# Compiler params (generation-aware VMEM budget, parallel grid semantics)
# ---------------------------------------------------------------------------
def _vmem_limit_bytes():
    cap = 64 * 1024 * 1024  # conservative default (v7x physical VMEM per TC)
    try:
        info = pltpu.get_tpu_info()
        cap = int(getattr(info, "vmem_capacity_bytes", cap) or cap)
    except Exception:
        pass
    return int(cap * 3 // 4)  # leave headroom below physical VMEM


_CPARAMS = pltpu.CompilerParams(
    dimension_semantics=("parallel",),   # 1-D grid over independent row tiles
    vmem_limit_bytes=_vmem_limit_bytes(),
)


# ---------------------------------------------------------------------------
# Pallas kernels
# ---------------------------------------------------------------------------
def _bottleneck_kernel(xs_ref, id_ref, w1_ref, s1_ref, b1_ref,
                       w2_ref, s2_ref, b2_ref, w3_ref, s3_ref, b3_ref,
                       *rest, th, wpix, himg, n_row_tiles, has_ds):
    """Fused bottleneck on one haloed row tile.

    xs_ref : (1, th+2, W, Cin)   bf16   main-path input rows with +-1 row halo
    id_ref : (1, th,   W, Cid)   bf16   identity source rows (Cid=Cout, or Cin if
                                        the downsample 1x1 projection is fused in)
    w1_ref : (Cin, width)        bf16   conv1 (1x1)
    w2_ref : (9*width, width)    bf16   conv2 (3x3), taps flattened along K
    w3_ref : (width, Cout)       bf16   conv3 (1x1)
    s*/b*  : (1, C)              f32    folded BN scale / shift
    rest   : [dsw (Cid,Cout), dss (1,Cout), dsb (1,Cout)] if has_ds, then out_ref
    out    : (1, th, W, Cout)    f32
    """
    out_ref = rest[-1]
    if has_ds:
        dsw_ref, dss_ref, dsb_ref = rest[0], rest[1], rest[2]

    thp = th + 2
    cin = xs_ref.shape[-1]
    width = w1_ref.shape[-1]
    cout = w3_ref.shape[-1]

    # ---- conv1 (1x1) + bn1 + relu on the full haloed slab (no zero-init acc) ----
    x = xs_ref[0]                                              # (th+2, W, Cin)
    h1 = jnp.dot(x.reshape(thp * wpix, cin), w1_ref[...],
                 preferred_element_type=jnp.float32)           # (thp*W, width) f32
    h1 = h1 * s1_ref[...] + b1_ref[...]
    h1 = jnp.maximum(h1, 0.0).reshape(thp, wpix, width)

    # Rows of the slab that fall outside the image must be zero so that conv2
    # sees zero padding of the conv1 *output* (exactly like padding=1 in torch).
    t_local = pl.program_id(0) % n_row_tiles
    row0 = t_local * th                                        # padded-row index of slab row 0
    rows = row0 + lax.broadcasted_iota(jnp.int32, (thp, 1, 1), 0)
    valid = (rows >= 1) & (rows <= himg)
    h1 = jnp.where(valid, h1, 0.0).astype(jnp.bfloat16)

    # zero-pad the W axis by 1 on each side (explicit concat; stays in VMEM)
    zcol = jnp.zeros((thp, 1, width), jnp.bfloat16)
    h1p = jnp.concatenate([zcol, h1, zcol], axis=1)            # (thp, W+2, width)

    # ---- conv2 (3x3) as ONE wide matmul: K = 9*width keeps the MXU deep -------
    taps = [h1p[dy:dy + th, dx:dx + wpix, :].reshape(th * wpix, width)
            for dy in range(3) for dx in range(3)]
    patch = jnp.concatenate(taps, axis=-1)                     # (th*W, 9*width) bf16
    h2 = jnp.dot(patch, w2_ref[...], preferred_element_type=jnp.float32)
    h2 = h2 * s2_ref[...] + b2_ref[...]
    h2 = jnp.maximum(h2, 0.0).astype(jnp.bfloat16)
    # TODO(synk): dropout(p=0.1) here is the identity in eval mode.

    # ---- conv3 (1x1) + bn3 ------------------------------------------------------
    h3 = jnp.dot(h2, w3_ref[...], preferred_element_type=jnp.float32)
    h3 = h3 * s3_ref[...] + b3_ref[...]                        # (th*W, Cout) f32

    # ---- residual: identity, or fused downsample 1x1 conv + BN -----------------
    idt = id_ref[0].reshape(th * wpix, id_ref.shape[-1])
    if has_ds:
        idp = jnp.dot(idt, dsw_ref[...], preferred_element_type=jnp.float32)
        idp = idp * dss_ref[...] + dsb_ref[...]
    else:
        idp = idt.astype(jnp.float32)

    out = jnp.maximum(h3 + idp, 0.0)
    out_ref[0] = out.reshape(th, wpix, cout).astype(out_ref.dtype)


def _avgpool2x2_kernel(x_ref, out_ref):
    """2x2 average pool; quadrant extraction done in-kernel via strided slices."""
    x = x_ref[0].astype(jnp.float32)                           # (2*tp, W, C)
    a = x[0::2, 0::2, :]
    b = x[0::2, 1::2, :]
    c = x[1::2, 0::2, :]
    d = x[1::2, 1::2, :]
    out_ref[0] = ((a + b + c + d) * 0.25).astype(out_ref.dtype)


# ---------------------------------------------------------------------------
# Wrappers
# ---------------------------------------------------------------------------
def avg_pool_2x2(x):
    """x: (N, H, W, C) -> (N, H//2, W//2, C) via a row-tiled Pallas kernel."""
    n, h, w, c = x.shape
    assert h % 2 == 0 and w % 2 == 0, "avg_pool2d(2) requires even H and W"
    ho, wo = h // 2, w // 2
    tp = min(8, ho)
    assert ho % tp == 0
    n_pt = ho // tp
    xr = x.reshape(n * n_pt, 2 * tp, w, c)                     # free reshape, no copy
    out = pl.pallas_call(
        _avgpool2x2_kernel,
        grid=(n * n_pt,),
        in_specs=[pl.BlockSpec((1, 2 * tp, w, c), lambda t: (t, 0, 0, 0))],
        out_specs=pl.BlockSpec((1, tp, wo, c), lambda t: (t, 0, 0, 0)),
        out_shape=jax.ShapeDtypeStruct((n * n_pt, tp, wo, c), x.dtype),
        compiler_params=_CPARAMS,
    )(xr)
    return out.reshape(n, ho, wo, c)


def _row_slabs(xp, th, n_tiles):
    """(N, Hc+2, W, C) padded input -> (N*n_tiles, th+2, W, C) haloed row slabs.

    Only the 2 halo rows per tile are duplicated (~(th+2)/th of the activation),
    instead of materializing 9 shifted copies in HBM.
    """
    n, _, w, c = xp.shape
    slabs = jnp.stack([xp[:, t * th:t * th + th + 2] for t in range(n_tiles)], axis=1)
    return slabs.reshape(n * n_tiles, th + 2, w, c)


def _bottleneck_forward_nhwc(x, params, *, stride, row_tile):
    n, h, w, cin = x.shape
    has_ds = "ds_w" in params
    width = params["w1"].shape[-1]
    cout = params["w3"].shape[-1]
    assert stride in (1, 2)
    assert stride == 1 or has_ds, "stride=2 requires a downsample projection"
    if not has_ds:
        assert cin == cout, "identity residual requires inplanes == planes*expansion"

    # main-path input (pooled if stride==2); the pooled tensor is reused below.
    xm = avg_pool_2x2(x) if stride == 2 else x
    hc, wc = xm.shape[1], xm.shape[2]

    th = min(row_tile, hc)
    assert hc % th == 0, "row_tile must divide the (pooled) height"
    n_tiles = hc // th
    t_total = n * n_tiles

    # bf16 at the kernel boundary (f32 accumulation inside the kernel).
    xmb = xm.astype(jnp.bfloat16)
    xp = jnp.pad(xmb, ((0, 0), (1, 1), (0, 0), (0, 0)))        # pad rows for 3x3 conv
    xs = _row_slabs(xp, th, n_tiles)                           # (T, th+2, wc, cin)

    # identity source has the same spatial dims as the output, so its tiling is a
    # pure reshape (no copy).  With a downsample, the 1x1 projection is fused
    # into the kernel, so we feed the pooled x directly.
    ident = xm if has_ds else x
    cid = ident.shape[-1]
    idb = ident.astype(jnp.bfloat16).reshape(t_total, th, wc, cid)

    # weights already in kernel layout (built once at param construction); only a
    # dtype cast + free reshape happens per call.
    w1 = params["w1"].astype(jnp.bfloat16)                     # (Cin, width)
    w2 = params["w2"].reshape(9 * width, width).astype(jnp.bfloat16)
    w3 = params["w3"].astype(jnp.bfloat16)                     # (width, Cout)

    def _const(a):
        return pl.BlockSpec(a.shape, lambda t: (0, 0))

    args = [xs, idb,
            w1, params["s1"], params["b1"],
            w2, params["s2"], params["b2"],
            w3, params["s3"], params["b3"]]
    in_specs = [
        pl.BlockSpec((1, th + 2, wc, xs.shape[-1]), lambda t: (t, 0, 0, 0)),
        pl.BlockSpec((1, th, wc, cid), lambda t: (t, 0, 0, 0)),
        _const(w1), _const(params["s1"]), _const(params["b1"]),
        _const(w2), _const(params["s2"]), _const(params["b2"]),
        _const(w3), _const(params["s3"]), _const(params["b3"]),
    ]
    if has_ds:
        dsw = params["ds_w"].astype(jnp.bfloat16)
        args += [dsw, params["ds_s"], params["ds_b"]]
        in_specs += [_const(dsw), _const(params["ds_s"]), _const(params["ds_b"])]

    kernel = functools.partial(_bottleneck_kernel, th=th, wpix=wc, himg=hc,
                               n_row_tiles=n_tiles, has_ds=has_ds)
    # Output last dim = Cout = planes*4 (>=128 for planes>=32) -> lane-dense stores.
    out = pl.pallas_call(
        kernel,
        grid=(t_total,),
        in_specs=in_specs,
        out_specs=pl.BlockSpec((1, th, wc, cout), lambda t: (t, 0, 0, 0)),
        out_shape=jax.ShapeDtypeStruct((t_total, th, wc, cout), x.dtype),
        compiler_params=_CPARAMS,
    )(*args)
    return out.reshape(n, hc, wc, cout)


@functools.partial(jax.jit, static_argnames=("stride", "row_tile"))
def bottleneck_forward(x_nchw, params, *, stride=1, row_tile=8):
    """_ResnetBottleneck.forward (eval mode). NCHW in/out; NHWC internally."""
    x = jnp.transpose(x_nchw, (0, 2, 3, 1))
    y = _bottleneck_forward_nhwc(x, params, stride=stride, row_tile=row_tile)
    return jnp.transpose(y, (0, 3, 1, 2))


# ---------------------------------------------------------------------------
# Parameter construction (mirrors _ResnetBottleneck.__init__/init_weights)
# ---------------------------------------------------------------------------
def _bn_scale_shift(key, c, *, gamma_const=None, randomize=False):
    if randomize:  # non-trivial BN params for a stricter numerical check
        k1, k2, k3, k4 = jax.random.split(key, 4)
        gamma = jax.random.uniform(k1, (c,), jnp.float32, 0.5, 1.5)
        beta = 0.1 * jax.random.normal(k2, (c,), jnp.float32)
        mean = 0.1 * jax.random.normal(k3, (c,), jnp.float32)
        var = jax.random.uniform(k4, (c,), jnp.float32, 0.5, 1.5)
    else:          # init_bn + eval-mode fresh running stats
        g = 1.0 if gamma_const is None else gamma_const
        gamma = jnp.full((c,), g, jnp.float32)
        beta = jnp.zeros((c,), jnp.float32)
        mean = jnp.zeros((c,), jnp.float32)
        var = jnp.ones((c,), jnp.float32)
    scale = gamma / jnp.sqrt(var + _BN_EPS)
    shift = beta - mean * scale
    return scale.reshape(1, c), shift.reshape(1, c)


def _xavier_conv_hwio(key, kh, kw, cin, cout):
    fan_in, fan_out = cin * kh * kw, cout * kh * kw
    bound = math.sqrt(6.0 / (fan_in + fan_out))
    return jax.random.uniform(key, (kh, kw, cin, cout), jnp.float32, -bound, bound)


def make_bottleneck_params(key, inplanes, planes, *, base_width=64, groups=1,
                           with_downsample=False, randomize_bn=False):
    expansion = 4
    width = int(planes * (base_width / 64.0)) * groups
    outp = planes * expansion
    ks = jax.random.split(key, 8)
    p = {
        "w1": _xavier_conv_hwio(ks[0], 1, 1, inplanes, width).reshape(inplanes, width),
        "w2": _xavier_conv_hwio(ks[1], 3, 3, width, width),     # HWIO
        "w3": _xavier_conv_hwio(ks[2], 1, 1, width, outp).reshape(width, outp),
    }
    p["s1"], p["b1"] = _bn_scale_shift(ks[3], width, randomize=randomize_bn)
    p["s2"], p["b2"] = _bn_scale_shift(ks[4], width, randomize=randomize_bn)
    # init_weights(): nn.init.constant_(self.bn3.weight, 0)
    p["s3"], p["b3"] = _bn_scale_shift(ks[5], outp, gamma_const=0.0,
                                       randomize=randomize_bn)
    if with_downsample:
        # PANNs-style downsample: AvgPool2d(2) -> conv1x1 -> BN
        p["ds_w"] = _xavier_conv_hwio(ks[6], 1, 1, inplanes, outp).reshape(inplanes, outp)
        p["ds_s"], p["ds_b"] = _bn_scale_shift(ks[7], outp, randomize=randomize_bn)
    return p


# ---------------------------------------------------------------------------
# Pure-JAX reference (lax.conv) for numerical verification
# ---------------------------------------------------------------------------
def _ref_bn(x, s, b):
    return x * s + b


def _ref_conv1x1(x, w):
    return jnp.einsum("nhwc,cd->nhwd", x, w)


def _ref_conv3x3(x, w_hwio):
    return lax.conv_general_dilated(x, w_hwio, (1, 1), "SAME",
                                    dimension_numbers=("NHWC", "HWIO", "NHWC"))


def _ref_pool(x):
    n, h, w, c = x.shape
    return x.reshape(n, h // 2, 2, w // 2, 2, c).mean(axis=(2, 4))


def bottleneck_reference(x_nchw, params, *, stride=1):
    x = jnp.transpose(x_nchw, (0, 2, 3, 1))
    identity = x
    if stride == 2:
        x = _ref_pool(x)
    out = jnp.maximum(_ref_bn(_ref_conv1x1(x, params["w1"]), params["s1"], params["b1"]), 0.0)
    out = jnp.maximum(_ref_bn(_ref_conv3x3(out, params["w2"]), params["s2"], params["b2"]), 0.0)
    # dropout(p=0.1) -> identity in eval mode
    out = _ref_bn(_ref_conv1x1(out, params["w3"]), params["s3"], params["b3"])
    if "ds_w" in params:
        identity = _ref_bn(_ref_conv1x1(_ref_pool(identity), params["ds_w"]),
                           params["ds_s"], params["ds_b"])
    out = jnp.maximum(out + identity, 0.0)
    return jnp.transpose(out, (0, 3, 1, 2))


def _bf16_roundtrip(a):
    return a.astype(jnp.bfloat16).astype(jnp.float32)


def quantize_for_reference(x_nchw, params):
    """Round x / conv weights to bf16 (the kernel's boundary cast) so the reference
    checks the kernel math itself; BN scale/shift stay f32 in both paths."""
    pq = dict(params)
    for k in ("w1", "w2", "w3", "ds_w"):
        if k in pq:
            pq[k] = _bf16_roundtrip(pq[k])
    return _bf16_roundtrip(x_nchw), pq


# ---------------------------------------------------------------------------
if __name__ == "__main__":
    key = jax.random.PRNGKey(0)
    kx, kp1, kp2 = jax.random.split(key, 3)

    N, H, W = 2, 16, 16
    inplanes, planes = 128, 32            # width = 32, out channels = planes*4 = 128
    x = jax.random.normal(kx, (N, inplanes, H, W), jnp.float32)

    # --- config 1: stride=1, identity residual (inplanes == planes*expansion);
    #     randomized BN stats so conv3/bn3 numerics are actually exercised. -------
    params1 = make_bottleneck_params(kp1, inplanes, planes, randomize_bn=True)
    out1 = jax.block_until_ready(bottleneck_forward(x, params1, stride=1, row_tile=8))
    assert out1.shape == (N, planes * 4, H, W) and out1.dtype == jnp.float32
    xq1, pq1 = quantize_for_reference(x, params1)
    ref1 = jax.block_until_ready(bottleneck_reference(xq1, pq1, stride=1))
    np.testing.assert_allclose(np.asarray(out1), np.asarray(ref1), rtol=2e-2, atol=2e-2)

    # --- config 2: faithful init (bn3.weight = 0), stride=2 with the PANNs-style
    #     AvgPool2d(2) + conv1x1 + BN downsample fused into the kernel. ----------
    params2 = make_bottleneck_params(kp2, inplanes, planes, with_downsample=True)
    out2 = jax.block_until_ready(bottleneck_forward(x, params2, stride=2, row_tile=8))
    assert out2.shape == (N, planes * 4, H // 2, W // 2)
    xq2, pq2 = quantize_for_reference(x, params2)
    ref2 = jax.block_until_ready(bottleneck_reference(xq2, pq2, stride=2))
    np.testing.assert_allclose(np.asarray(out2), np.asarray(ref2), rtol=2e-2, atol=2e-2)

    print("KERNEL_OK")
</pallas_src>

<mosaic_0001>
module attributes {stable_mosaic.version = 11 : i64} {
  func.func @_bottleneck_kernel(%arg0: i32, %arg1: memref<1x10x16x128xbf16, #tpu.memory_space<vmem>>, %arg2: memref<1x8x16x128xbf16, #tpu.memory_space<vmem>>, %arg3: memref<128x32xbf16, #tpu.memory_space<vmem>>, %arg4: memref<1x32xf32, #tpu.memory_space<vmem>>, %arg5: memref<1x32xf32, #tpu.memory_space<vmem>>, %arg6: memref<288x32xbf16, #tpu.memory_space<vmem>>, %arg7: memref<1x32xf32, #tpu.memory_space<vmem>>, %arg8: memref<1x32xf32, #tpu.memory_space<vmem>>, %arg9: memref<32x128xbf16, #tpu.memory_space<vmem>>, %arg10: memref<1x128xf32, #tpu.memory_space<vmem>>, %arg11: memref<1x128xf32, #tpu.memory_space<vmem>>, %arg12: memref<1x8x16x128xf32, #tpu.memory_space<vmem>>) attributes {dimension_semantics = [#tpu.dimension_semantics<parallel>], iteration_bounds = array<i64: 4>, scalar_prefetch = 0 : i64, scratch_operands = 0 : i64, tpu.core_type = #tpu.core_type<tc>, window_params = [{transform_indices = @transform_0, window_bounds = array<i64: 1, 10, 16, 128>}, {transform_indices = @transform_1, window_bounds = array<i64: 1, 8, 16, 128>}, {pipeline_mode = #tpu.pipeline_mode<synchronous>, transform_indices = @transform_2, window_bounds = array<i64: 128, 32>}, {pipeline_mode = #tpu.pipeline_mode<synchronous>, transform_indices = @transform_3, window_bounds = array<i64: 1, 32>}, {pipeline_mode = #tpu.pipeline_mode<synchronous>, transform_indices = @transform_4, window_bounds = array<i64: 1, 32>}, {pipeline_mode = #tpu.pipeline_mode<synchronous>, transform_indices = @transform_5, window_bounds = array<i64: 288, 32>}, {pipeline_mode = #tpu.pipeline_mode<synchronous>, transform_indices = @transform_6, window_bounds = array<i64: 1, 32>}, {pipeline_mode = #tpu.pipeline_mode<synchronous>, transform_indices = @transform_7, window_bounds = array<i64: 1, 32>}, {pipeline_mode = #tpu.pipeline_mode<synchronous>, transform_indices = @transform_8, window_bounds = array<i64: 32, 128>}, {pipeline_mode = #tpu.pipeline_mode<synchronous>, transform_indices = @transform_9, window_bounds = array<i64: 1, 128>}, {pipeline_mode = #tpu.pipeline_mode<synchronous>, transform_indices = @transform_10, window_bounds = array<i64: 1, 128>}, {transform_indices = @transform_11, window_bounds = array<i64: 1, 8, 16, 128>}]} {
    %c0 = arith.constant 0 : index
    %c0_0 = arith.constant 0 : index
    %c0_1 = arith.constant 0 : index
    %c0_2 = arith.constant 0 : index
    %0 = vector.load %arg1[%c0, %c0_0, %c0_1, %c0_2] : memref<1x10x16x128xbf16, #tpu.memory_space<vmem>>, vector<1x10x16x128xbf16>
    %1 = vector.shape_cast %0 : vector<1x10x16x128xbf16> to vector<10x16x128xbf16>
    %2 = vector.shape_cast %1 : vector<10x16x128xbf16> to vector<160x128xbf16>
    %c0_3 = arith.constant 0 : index
    %c0_4 = arith.constant 0 : index
    %3 = vector.load %arg3[%c0_3, %c0_4] : memref<128x32xbf16, #tpu.memory_space<vmem>>, vector<128x32xbf16>
    %cst = arith.constant dense<0.000000e+00> : vector<160x32xf32>
    %4 = tpu.matmul %2, %3, %cst {dimension_numbers = #tpu.dot_dimension_numbers<[1], [0], [0], [1], [0, 0, 1, 1], [], []>} : vector<160x128xbf16>, vector<128x32xbf16>, vector<160x32xf32> -> vector<160x32xf32>
    %c0_5 = arith.constant 0 : index
    %c0_6 = arith.constant 0 : index
    %5 = vector.load %arg4[%c0_5, %c0_6] : memref<1x32xf32, #tpu.memory_space<vmem>>, vector<1x32xf32>
    %6 = vector.broadcast %5 : vector<1x32xf32> to vector<160x32xf32>
    %7 = arith.mulf %4, %6 : vector<160x32xf32>
    %c0_7 = arith.constant 0 : index
    %c0_8 = arith.constant 0 : index
    %8 = vector.load %arg5[%c0_7, %c0_8] : memref<1x32xf32, #tpu.memory_space<vmem>>, vector<1x32xf32>
    %9 = vector.broadcast %8 : vector<1x32xf32> to vector<160x32xf32>
    %10 = arith.addf %7, %9 : vector<160x32xf32>
    %cst_9 = arith.constant 0.000000e+00 : f32
    %11 = vector.broadcast %cst_9 : f32 to vector<160x32xf32>
    %12 = arith.maximumf %10, %11 : vector<160x32xf32>
    %13 = vector.shape_cast %12 : vector<160x32xf32> to vector<10x16x32xf32>
    %c2_i32 = arith.constant 2 : i32
    %c0_i32 = arith.constant 0 : i32
    %14 = arith.cmpi eq, %c2_i32, %c0_i32 : i32
    %c1_i32 = arith.constant 1 : i32
    %15 = arith.select %14, %c1_i32, %c2_i32 : i32
    %16 = arith.remsi %arg0, %15 : i32
    %c0_i32_10 = arith.constant 0 : i32
    %17 = arith.cmpi ne, %16, %c0_i32_10 : i32
    %c0_i32_11 = arith.constant 0 : i32
    %18 = arith.cmpi slt, %16, %c0_i32_11 : i32
    %c0_i32_12 = arith.constant 0 : i32
    %19 = arith.cmpi slt, %15, %c0_i32_12 : i32
    %20 = arith.xori %18, %19 : i1
    %21 = arith.andi %20, %17 : i1
    %22 = arith.addi %16, %15 : i32
    %23 = arith.select %21, %22, %16 : i32
    %c8_i32 = arith.constant 8 : i32
    %24 = arith.muli %23, %c8_i32 : i32
    %25 = tpu.iota {dimensions = array<i32: 0>} : vector<10x1x1xi32>
    %26 = vector.broadcast %24 : i32 to vector<10x1x1xi32>
    %27 = arith.addi %26, %25 : vector<10x1x1xi32>
    %c1_i32_13 = arith.constant 1 : i32
    %28 = vector.broadcast %c1_i32_13 : i32 to vector<10x1x1xi32>
    %29 = arith.cmpi sge, %27, %28 : vector<10x1x1xi32>
    %c16_i32 = arith.constant 16 : i32
    %30 = vector.broadcast %c16_i32 : i32 to vector<10x1x1xi32>
    %31 = arith.cmpi sle, %27, %30 : vector<10x1x1xi32>
    %32 = arith.andi %29, %31 : vector<10x1x1xi1>
    %cst_14 = arith.constant 0.000000e+00 : f32
    %33 = vector.shape_cast %32 : vector<10x1x1xi1> to vector<10x1x1xi1>
    %34 = vector.broadcast %33 : vector<10x1x1xi1> to vector<10x16x32xi1>
    %35 = vector.broadcast %cst_14 : f32 to vector<10x16x32xf32>
    %36 = arith.select %34, %13, %35 : vector<10x16x32xi1>, vector<10x16x32xf32>
    %37 = arith.truncf %36 : vector<10x16x32xf32> to vector<10x16x32xbf16>
    %cst_15 = arith.constant 0.000000e+00 : bf16
    %38 = vector.broadcast %cst_15 : bf16 to vector<10x1x32xbf16>
    %39 = tpu.concatenate %38, %37, %38 in 1 : vector<10x1x32xbf16>, vector<10x16x32xbf16>, vector<10x1x32xbf16> -> vector<10x18x32xbf16>
    %40 = vector.extract_strided_slice %39 {offsets = [0, 0, 0], sizes = [8, 16, 32], strides = [1, 1, 1]} : vector<10x18x32xbf16> to vector<8x16x32xbf16>
    %41 = vector.shape_cast %40 : vector<8x16x32xbf16> to vector<128x32xbf16>
    %42 = vector.extract_strided_slice %39 {offsets = [0, 1, 0], sizes = [8, 16, 32], strides = [1, 1, 1]} : vector<10x18x32xbf16> to vector<8x16x32xbf16>
    %43 = vector.shape_cast %42 : vector<8x16x32xbf16> to vector<128x32xbf16>
    %44 = vector.extract_strided_slice %39 {offsets = [0, 2, 0], sizes = [8, 16, 32], strides = [1, 1, 1]} : vector<10x18x32xbf16> to vector<8x16x32xbf16>
    %45 = vector.shape_cast %44 : vector<8x16x32xbf16> to vector<128x32xbf16>
    %46 = vector.extract_strided_slice %39 {offsets = [1, 0, 0], sizes = [8, 16, 32], strides = [1, 1, 1]} : vector<10x18x32xbf16> to vector<8x16x32xbf16>
    %47 = vector.shape_cast %46 : vector<8x16x32xbf16> to vector<128x32xbf16>
    %48 = vector.extract_strided_slice %39 {offsets = [1, 1, 0], sizes = [8, 16, 32], strides = [1, 1, 1]} : vector<10x18x32xbf16> to vector<8x16x32xbf16>
    %49 = vector.shape_cast %48 : vector<8x16x32xbf16> to vector<128x32xbf16>
    %50 = vector.extract_strided_slice %39 {offsets = [1, 2, 0], sizes = [8, 16, 32], strides = [1, 1, 1]} : vector<10x18x32xbf16> to vector<8x16x32xbf16>
    %51 = vector.shape_cast %50 : vector<8x16x32xbf16> to vector<128x32xbf16>
    %52 = vector.extract_strided_slice %39 {offsets = [2, 0, 0], sizes = [8, 16, 32], strides = [1, 1, 1]} : vector<10x18x32xbf16> to vector<8x16x32xbf16>
    %53 = vector.shape_cast %52 : vector<8x16x32xbf16> to vector<128x32xbf16>
    %54 = vector.extract_strided_slice %39 {offsets = [2, 1, 0], sizes = [8, 16, 32], strides = [1, 1, 1]} : vector<10x18x32xbf16> to vector<8x16x32xbf16>
    %55 = vector.shape_cast %54 : vector<8x16x32xbf16> to vector<128x32xbf16>
    %56 = vector.extract_strided_slice %39 {offsets = [2, 2, 0], sizes = [8, 16, 32], strides = [1, 1, 1]} : vector<10x18x32xbf16> to vector<8x16x32xbf16>
    %57 = vector.shape_cast %56 : vector<8x16x32xbf16> to vector<128x32xbf16>
    %58 = tpu.concatenate %41, %43, %45, %47, %49, %51, %53, %55, %57 in 1 : vector<128x32xbf16>, vector<128x32xbf16>, vector<128x32xbf16>, vector<128x32xbf16>, vector<128x32xbf16>, vector<128x32xbf16>, vector<128x32xbf16>, vector<128x32xbf16>, vector<128x32xbf16> -> vector<128x288xbf16>
    %c0_16 = arith.constant 0 : index
    %c0_17 = arith.constant 0 : index
    %59 = vector.load %arg6[%c0_16, %c0_17] : memref<288x32xbf16, #tpu.memory_space<vmem>>, vector<288x32xbf16>
    %cst_18 = arith.constant dense<0.000000e+00> : vector<128x32xf32>
    %60 = tpu.matmul %58, %59, %cst_18 {dimension_numbers = #tpu.dot_dimension_numbers<[1], [0], [0], [1], [0, 0, 1, 1], [], []>} : vector<128x288xbf16>, vector<288x32xbf16>, vector<128x32xf32> -> vector<128x32xf32>
    %c0_19 = arith.constant 0 : index
    %c0_20 = arith.constant 0 : index
    %61 = vector.load %arg7[%c0_19, %c0_20] : memref<1x32xf32, #tpu.memory_space<vmem>>, vector<1x32xf32>
    %62 = vector.broadcast %61 : vector<1x32xf32> to vector<128x32xf32>
    %63 = arith.mulf %60, %62 : vector<128x32xf32>
    %c0_21 = arith.constant 0 : index
    %c0_22 = arith.constant 0 : index
    %64 = vector.load %arg8[%c0_21, %c0_22] : memref<1x32xf32, #tpu.memory_space<vmem>>, vector<1x32xf32>
    %65 = vector.broadcast %64 : vector<1x32xf32> to vector<128x32xf32>
    %66 = arith.addf %63, %65 : vector<128x32xf32>
    %cst_23 = arith.constant 0.000000e+00 : f32
    %67 = vector.broadcast %cst_23 : f32 to vector<128x32xf32>
    %68 = arith.maximumf %66, %67 : vector<128x32xf32>
    %69 = arith.truncf %68 : vector<128x32xf32> to vector<128x32xbf16>
    %c0_24 = arith.constant 0 : index
    %c0_25 = arith.constant 0 : index
    %70 = vector.load %arg9[%c0_24, %c0_25] : memref<32x128xbf16, #tpu.memory_space<vmem>>, vector<32x128xbf16>
    %cst_26 = arith.constant dense<0.000000e+00> : vector<128x128xf32>
    %71 = tpu.matmul %69, %70, %cst_26 {dimension_numbers = #tpu.dot_dimension_numbers<[1], [0], [0], [1], [0, 0, 1, 1], [], []>} : vector<128x32xbf16>, vector<32x128xbf16>, vector<128x128xf32> -> vector<128x128xf32>
    %c0_27 = arith.constant 0 : index
    %c0_28 = arith.constant 0 : index
    %72 = vector.load %arg10[%c0_27, %c0_28] : memref<1x128xf32, #tpu.memory_space<vmem>>, vector<1x128xf32>
    %73 = vector.broadcast %72 : vector<1x128xf32> to vector<128x128xf32>
    %74 = arith.mulf %71, %73 : vector<128x128xf32>
    %c0_29 = arith.constant 0 : index
    %c0_30 = arith.constant 0 : index
    %75 = vector.load %arg11[%c0_29, %c0_30] : memref<1x128xf32, #tpu.memory_space<vmem>>, vector<1x128xf32>
    %76 = vector.broadcast %75 : vector<1x128xf32> to vector<128x128xf32>
    %77 = arith.addf %74, %76 : vector<128x128xf32>
    %c0_31 = arith.constant 0 : index
    %c0_32 = arith.constant 0 : index
    %c0_33 = arith.constant 0 : index
    %c0_34 = arith.constant 0 : index
    %78 = vector.load %arg2[%c0_31, %c0_32, %c0_33, %c0_34] : memref<1x8x16x128xbf16, #tpu.memory_space<vmem>>, vector<1x8x16x128xbf16>
    %79 = vector.shape_cast %78 : vector<1x8x16x128xbf16> to vector<8x16x128xbf16>
    %80 = vector.shape_cast %79 : vector<8x16x128xbf16> to vector<128x128xbf16>
    %81 = arith.extf %80 : vector<128x128xbf16> to vector<128x128xf32>
    %82 = arith.addf %77, %81 : vector<128x128xf32>
    %cst_35 = arith.constant 0.000000e+00 : f32
    %83 = vector.broadcast %cst_35 : f32 to vector<128x128xf32>
    %84 = arith.maximumf %82, %83 : vector<128x128xf32>
    %85 = vector.shape_cast %84 : vector<128x128xf32> to vector<8x16x128xf32>
    %c0_36 = arith.constant 0 : index
    %c0_37 = arith.constant 0 : index
    %c0_38 = arith.constant 0 : index
    %c0_39 = arith.constant 0 : index
    %86 = vector.load %arg12[%c0_36, %c0_37, %c0_38, %c0_39] : memref<1x8x16x128xf32, #tpu.memory_space<vmem>>, vector<1x8x16x128xf32>
    %87 = vector.shape_cast %86 : vector<1x8x16x128xf32> to vector<8x16x128xf32>
    %88 = vector.shape_cast %85 : vector<8x16x128xf32> to vector<1x8x16x128xf32>
    tpu.vector_store %arg12[%c0_36, %c0_37, %c0_38, %c0_39], %88 {strides = array<i32>} : memref<1x8x16x128xf32, #tpu.memory_space<vmem>>, vector<1x8x16x128xf32>,
    return
  }
  func.func @transform_0(%arg0: i32) -> (i32, i32, i32, i32) {
    %c0_i32 = arith.constant 0 : i32
    %c0_i32_0 = arith.constant 0 : i32
    %c0_i32_1 = arith.constant 0 : i32
    %c0_i32_2 = arith.constant 0 : i32
    return %arg0, %c0_i32, %c0_i32_0, %c0_i32_1 : i32, i32, i32, i32
  }
  func.func @transform_1(%arg0: i32) -> (i32, i32, i32, i32) {
    %c0_i32 = arith.constant 0 : i32
    %c0_i32_0 = arith.constant 0 : i32
    %c0_i32_1 = arith.constant 0 : i32
    %c0_i32_2 = arith.constant 0 : i32
    return %arg0, %c0_i32, %c0_i32_0, %c0_i32_1 : i32, i32, i32, i32
  }
  func.func @transform_2(%arg0: i32) -> (i32, i32) {
    %c0_i32 = arith.constant 0 : i32
    %c0_i32_0 = arith.constant 0 : i32
    %c0_i32_1 = arith.constant 0 : i32
    return %c0_i32, %c0_i32_0 : i32, i32
  }
  func.func @transform_3(%arg0: i32) -> (i32, i32) {
    %c0_i32 = arith.constant 0 : i32
    %c0_i32_0 = arith.constant 0 : i32
    %c0_i32_1 = arith.constant 0 : i32
    return %c0_i32, %c0_i32_0 : i32, i32
  }
  func.func @transform_4(%arg0: i32) -> (i32, i32) {
    %c0_i32 = arith.constant 0 : i32
    %c0_i32_0 = arith.constant 0 : i32
    %c0_i32_1 = arith.constant 0 : i32
    return %c0_i32, %c0_i32_0 : i32, i32
  }
  func.func @transform_5(%arg0: i32) -> (i32, i32) {
    %c0_i32 = arith.constant 0 : i32
    %c0_i32_0 = arith.constant 0 : i32
    %c0_i32_1 = arith.constant 0 : i32
    return %c0_i32, %c0_i32_0 : i32, i32
  }
  func.func @transform_6(%arg0: i32) -> (i32, i32) {
    %c0_i32 = arith.constant 0 : i32
    %c0_i32_0 = arith.constant 0 : i32
    %c0_i32_1 = arith.constant 0 : i32
    return %c0_i32, %c0_i32_0 : i32, i32
  }
  func.func @transform_7(%arg0: i32) -> (i32, i32) {
    %c0_i32 = arith.constant 0 : i32
    %c0_i32_0 = arith.constant 0 : i32
    %c0_i32_1 = arith.constant 0 : i32
    return %c0_i32, %c0_i32_0 : i32, i32
  }
  func.func @transform_8(%arg0: i32) -> (i32, i32) {
    %c0_i32 = arith.constant 0 : i32
    %c0_i32_0 = arith.constant 0 : i32
    %c0_i32_1 = arith.constant 0 : i32
    return %c0_i32, %c0_i32_0 : i32, i32
  }
  func.func @transform_9(%arg0: i32) -> (i32, i32) {
    %c0_i32 = arith.constant 0 : i32
    %c0_i32_0 = arith.constant 0 : i32
    %c0_i32_1 = arith.constant 0 : i32
    return %c0_i32, %c0_i32_0 : i32, i32
  }
  func.func @transform_10(%arg0: i32) -> (i32, i32) {
    %c0_i32 = arith.constant 0 : i32
    %c0_i32_0 = arith.constant 0 : i32
    %c0_i32_1 = arith.constant 0 : i32
    return %c0_i32, %c0_i32_0 : i32, i32
  }
  func.func @transform_11(%arg0: i32) -> (i32, i32, i32, i32) {
    %c0_i32 = arith.constant 0 : i32
    %c0_i32_0 = arith.constant 0 : i32
    %c0_i32_1 = arith.constant 0 : i32
    %c0_i32_2 = arith.constant 0 : i32
    return %arg0, %c0_i32, %c0_i32_0, %c0_i32_1 : i32, i32, i32, i32
  }
}

</mosaic_0001>

<llo_original>
// kernel: bottleneck_forward.1
$region0: #{bottleneck_forward.1}
  #allocation0 [shape = 'u32[]', space=smem, size = 0x4, offset = 0x4, fixed_abs, tag = 'smem constant byte address 0x4 - core index']
  #allocation1 [shape = 'u32[144,128]{1,0:T(1,128)}', space=vmem, size = 0x12000, scoped, tag = 'internal scratch']
  %s0 = inlined_call_operand.vmem [shape: bf16[4,10,16,128], index: 0, kind: input, shape index: {}]
  %s1 = inlined_call_operand.vmem [shape: bf16[4,8,16,128], index: 1, kind: input, shape index: {}]
  %s2 = inlined_call_operand.vmem [shape: bf16[128,32], index: 2, kind: input, shape index: {}]
  %s3 = inlined_call_operand.vmem [shape: f32[1,32], index: 3, kind: input, shape index: {}]
  %s4 = inlined_call_operand.vmem [shape: f32[1,32], index: 4, kind: input, shape index: {}]
  %s5 = inlined_call_operand.vmem [shape: bf16[288,32], index: 5, kind: input, shape index: {}]
  %s6 = inlined_call_operand.vmem [shape: f32[1,32], index: 6, kind: input, shape index: {}]
  %s7 = inlined_call_operand.vmem [shape: f32[1,32], index: 7, kind: input, shape index: {}]
  %s8 = inlined_call_operand.vmem [shape: bf16[32,128], index: 8, kind: input, shape index: {}]
  %s9 = inlined_call_operand.vmem [shape: f32[1,128], index: 9, kind: input, shape index: {}]
  %s10 = inlined_call_operand.vmem [shape: f32[1,128], index: 10, kind: input, shape index: {}]
  %s11 = inlined_call_operand.hbm [shape: f32[4,8,16,128], index: 11, kind: output, shape index: {}]
  %s12 = sld [smem:[#allocation0]]
  $region77: #{bottleneck_forward.1} parent=0
    _
  %s14 = ssub.s32 1, %s12
  %s15 = scalar_select 0, %s14, %s12
  $region1: #{bottleneck_forward.1} parent=0
    #allocation2 [shape = 'u8[131072]{0}', space=vmem, size = 0x20000, scoped, tag = 'output window, operand 0']
    #allocation3 [shape = 's32[2]{0}', space=sflag, size = 0x8, scoped, tag = 'scoped memory for bottleneck_forward.1']
    %16 = vsyncpa [#allocation3], 0
    %s17 = scalar_lea.sflag [#allocation3], 1
    %18 = vsyncpa %s17, 0
    loop: start=0, step=1, limit=6
    $region2: #{bottleneck_forward.1} parent=1 // loop_pre_header
      _
    $region3: #{bottleneck_forward.1} parent=1 // loop_header
      %s20 = sphi 0, %s24
      %p21 = scmp.ge.s32.totalorder %s20, 6
      %s30 = sphi 0, %s32
      %s33 = sphi 0, %s30
      %s34 = sphi 0, %s33
      %s50 = sphi 0, %s34
      %s56 = sphi 0, %s58
      %s59 = sphi 0, %s56
      %s60 = sphi 0, %s59
      %s76 = sphi 0, %s60
      %s80 = sphi 0, %s80
      %s82 = sphi 0, %s80
      %s83 = sphi 0, %s82
      %s97 = sphi 0, %s83
      %s101 = sphi 0, %s101
      %s103 = sphi 0, %s101
      %s104 = sphi 0, %s103
      %s118 = sphi 0, %s104
      %s122 = sphi 0, %s122
      %s124 = sphi 0, %s122
      %s125 = sphi 0, %s124
      %s139 = sphi 0, %s125
      %s143 = sphi 0, %s143
      %s145 = sphi 0, %s143
      %s146 = sphi 0, %s145
      %s160 = sphi 0, %s146
      %s164 = sphi 0, %s164
      %s166 = sphi 0, %s164
      %s167 = sphi 0, %s166
      %s181 = sphi 0, %s167
      %s185 = sphi 0, %s185
      %s187 = sphi 0, %s185
      %s188 = sphi 0, %s187
      %s202 = sphi 0, %s188
      %s206 = sphi 0, %s206
      %s208 = sphi 0, %s206
      %s209 = sphi 0, %s208
      %s223 = sphi 0, %s209
      %s227 = sphi 0, %s227
      %s229 = sphi 0, %s227
      %s230 = sphi 0, %s229
      %s244 = sphi 0, %s230
      %s248 = sphi 0, %s248
      %s250 = sphi 0, %s248
      %s251 = sphi 0, %s250
      %s265 = sphi 0, %s251
      %s271 = sphi 0, %s273
      %s274 = sphi 0, %s271
      %s275 = sphi 0, %s274
      %s291 = sphi 0, %s275
    $region4: #{bottleneck_forward.1} parent=1 // loop_header_branch
      %23 = sbr.rel (%p21) target = $region8
    $region5: #{bottleneck_forward.1} parent=1 // loop_body
      %s25 = ssub.s32 %s20, 1
      %s26 = ssub.s32 %s20, 2
      %s27 = sadd.s32 %s20, 1
      %s28 = ssub.s32 %s20, %s27
      %p29 = scmp.eq.s32.totalorder %s28, 0
      %s31 = sadd.s32 %s30, 1
      %s32 = scalar_select %p29, %s30, %s31
      %p35 = pneg %p29
      %p36 = scmp.eq.s32.totalorder %s20, 3
      %p37 = por %p35, %p36
      %p38 = scmp.ne.s32.totalorder %s30, %s33
      %p39 = scmp.eq.s32.totalorder %s20, 0
      %p40 = por %p38, %p39
      %p41 = scmp.ne.s32.totalorder %s30, %s33
      %p42 = scmp.eq.s32.totalorder %s25, 3
      %p43 = por %p41, %p42
      %p44 = scmp.ne.s32.totalorder %s33, %s34
      %p45 = scmp.eq.s32.totalorder %s25, 0
      %p46 = por %p44, %p45
      %p47 = scmp.ne.s32.totalorder %s33, %s34
      %p48 = scmp.eq.s32.totalorder %s26, 3
      %p49 = por %p47, %p48
      %p51 = scmp.ne.s32.totalorder %s34, %s50
      %p52 = scmp.eq.s32.totalorder %s26, 0
      %p53 = por %p51, %p52
      %s54 = ssub.s32 %s20, %s27
      %p55 = scmp.eq.s32.totalorder %s54, 0
      %s57 = sadd.s32 %s56, 1
      %s58 = scalar_select %p55, %s56, %s57
      %p61 = pneg %p55
      %p62 = scmp.eq.s32.totalorder %s20, 3
      %p63 = por %p61, %p62
      %p64 = scmp.ne.s32.totalorder %s56, %s59
      %p65 = scmp.eq.s32.totalorder %s20, 0
      %p66 = por %p64, %p65
      %p67 = scmp.ne.s32.totalorder %s56, %s59
      %p68 = scmp.eq.s32.totalorder %s25, 3
      %p69 = por %p67, %p68
      %p70 = scmp.ne.s32.totalorder %s59, %s60
      %p71 = scmp.eq.s32.totalorder %s25, 0
      %p72 = por %p70, %p71
      %p73 = scmp.ne.s32.totalorder %s59, %s60
      %p74 = scmp.eq.s32.totalorder %s26, 3
      %p75 = por %p73, %p74
      %p77 = scmp.ne.s32.totalorder %s60, %s76
      %p78 = scmp.eq.s32.totalorder %s26, 0
      %p79 = por %p77, %p78
      %s81 = sadd.s32 %s80, 1
      %p84 = scmp.eq.s32.totalorder %s20, 3
      %p85 = scmp.ne.s32.totalorder %s80, %s82
      %p86 = scmp.eq.s32.totalorder %s20, 0
      %p87 = por %p85, %p86
      %p88 = scmp.ne.s32.totalorder %s80, %s82
      %p89 = scmp.eq.s32.totalorder %s25, 3
      %p90 = por %p88, %p89
      %p91 = scmp.ne.s32.totalorder %s82, %s83
      %p92 = scmp.eq.s32.totalorder %s25, 0
      %p93 = por %p91, %p92
      %p94 = scmp.ne.s32.totalorder %s82, %s83
      %p95 = scmp.eq.s32.totalorder %s26, 3
      %p96 = por %p94, %p95
      %p98 = scmp.ne.s32.totalorder %s83, %s97
      %p99 = scmp.eq.s32.totalorder %s26, 0
      %p100 = por %p98, %p99
      %s102 = sadd.s32 %s101, 1
      %p105 = scmp.eq.s32.totalorder %s20, 3
      %p106 = scmp.ne.s32.totalorder %s101, %s103
      %p107 = scmp.eq.s32.totalorder %s20, 0
      %p108 = por %p106, %p107
      %p109 = scmp.ne.s32.totalorder %s101, %s103
      %p110 = scmp.eq.s32.totalorder %s25, 3
      %p111 = por %p109, %p110
      %p112 = scmp.ne.s32.totalorder %s103, %s104
      %p113 = scmp.eq.s32.totalorder %s25, 0
      %p114 = por %p112, %p113
      %p115 = scmp.ne.s32.totalorder %s103, %s104
      %p116 = scmp.eq.s32.totalorder %s26, 3
      %p117 = por %p115, %p116
      %p119 = scmp.ne.s32.totalorder %s104, %s118
      %p120 = scmp.eq.s32.totalorder %s26, 0
      %p121 = por %p119, %p120
      %s123 = sadd.s32 %s122, 1
      %p126 = scmp.eq.s32.totalorder %s20, 3
      %p127 = scmp.ne.s32.totalorder %s122, %s124
      %p128 = scmp.eq.s32.totalorder %s20, 0
      %p129 = por %p127, %p128
      %p130 = scmp.ne.s32.totalorder %s122, %s124
      %p131 = scmp.eq.s32.totalorder %s25, 3
      %p132 = por %p130, %p131
      %p133 = scmp.ne.s32.totalorder %s124, %s125
      %p134 = scmp.eq.s32.totalorder %s25, 0
      %p135 = por %p133, %p134
      %p136 = scmp.ne.s32.totalorder %s124, %s125
      %p137 = scmp.eq.s32.totalorder %s26, 3
      %p138 = por %p136, %p137
      %p140 = scmp.ne.s32.totalorder %s125, %s139
      %p141 = scmp.eq.s32.totalorder %s26, 0
      %p142 = por %p140, %p141
      %s144 = sadd.s32 %s143, 1
      %p147 = scmp.eq.s32.totalorder %s20, 3
      %p148 = scmp.ne.s32.totalorder %s143, %s145
      %p149 = scmp.eq.s32.totalorder %s20, 0
      %p150 = por %p148, %p149
      %p151 = scmp.ne.s32.totalorder %s143, %s145
      %p152 = scmp.eq.s32.totalorder %s25, 3
      %p153 = por %p151, %p152
      %p154 = scmp.ne.s32.totalorder %s145, %s146
      %p155 = scmp.eq.s32.totalorder %s25, 0
      %p156 = por %p154, %p155
      %p157 = scmp.ne.s32.totalorder %s145, %s146
      %p158 = scmp.eq.s32.totalorder %s26, 3
      %p159 = por %p157, %p158
      %p161 = scmp.ne.s32.totalorder %s146, %s160
      %p162 = scmp.eq.s32.totalorder %s26, 0
      %p163 = por %p161, %p162
      %s165 = sadd.s32 %s164, 1
      %p168 = scmp.eq.s32.totalorder %s20, 3
      %p169 = scmp.ne.s32.totalorder %s164, %s166
      %p170 = scmp.eq.s32.totalorder %s20, 0
      %p171 = por %p169, %p170
      %p172 = scmp.ne.s32.totalorder %s164, %s166
      %p173 = scmp.eq.s32.totalorder %s25, 3
      %p174 = por %p172, %p173
      %p175 = scmp.ne.s32.totalorder %s166, %s167
      %p176 = scmp.eq.s32.totalorder %s25, 0
      %p177 = por %p175, %p176
      %p178 = scmp.ne.s32.totalorder %s166, %s167
      %p179 = scmp.eq.s32.totalorder %s26, 3
      %p180 = por %p178, %p179
      %p182 = scmp.ne.s32.totalorder %s167, %s181
      %p183 = scmp.eq.s32.totalorder %s26, 0
      %p184 = por %p182, %p183
      %s186 = sadd.s32 %s185, 1
      %p189 = scmp.eq.s32.totalorder %s20, 3
      %p190 = scmp.ne.s32.totalorder %s185, %s187
      %p191 = scmp.eq.s32.totalorder %s20, 0
      %p192 = por %p190, %p191
      %p193 = scmp.ne.s32.totalorder %s185, %s187
      %p194 = scmp.eq.s32.totalorder %s25, 3
      %p195 = por %p193, %p194
      %p196 = scmp.ne.s32.totalorder %s187, %s188
      %p197 = scmp.eq.s32.totalorder %s25, 0
      %p198 = por %p196, %p197
      %p199 = scmp.ne.s32.totalorder %s187, %s188
      %p200 = scmp.eq.s32.totalorder %s26, 3
      %p201 = por %p199, %p200
      %p203 = scmp.ne.s32.totalorder %s188, %s202
      %p204 = scmp.eq.s32.totalorder %s26, 0
      %p205 = por %p203, %p204
      %s207 = sadd.s32 %s206, 1
      %p210 = scmp.eq.s32.totalorder %s20, 3
      %p211 = scmp.ne.s32.totalorder %s206, %s208
      %p212 = scmp.eq.s32.totalorder %s20, 0
      %p213 = por %p211, %p212
      %p214 = scmp.ne.s32.totalorder %s206, %s208
      %p215 = scmp.eq.s32.totalorder %s25, 3
      %p216 = por %p214, %p215
      %p217 = scmp.ne.s32.totalorder %s208, %s209
      %p218 = scmp.eq.s32.totalorder %s25, 0
      %p219 = por %p217, %p218
      %p220 = scmp.ne.s32.totalorder %s208, %s209
      %p221 = scmp.eq.s32.totalorder %s26, 3
      %p222 = por %p220, %p221
      %p224 = scmp.ne.s32.totalorder %s209, %s223
      %p225 = scmp.eq.s32.totalorder %s26, 0
      %p226 = por %p224, %p225
      %s228 = sadd.s32 %s227, 1
      %p231 = scmp.eq.s32.totalorder %s20, 3
      %p232 = scmp.ne.s32.totalorder %s227, %s229
      %p233 = scmp.eq.s32.totalorder %s20, 0
      %p234 = por %p232, %p233
      %p235 = scmp.ne.s32.totalorder %s227, %s229
      %p236 = scmp.eq.s32.totalorder %s25, 3
      %p237 = por %p235, %p236
      %p238 = scmp.ne.s32.totalorder %s229, %s230
      %p239 = scmp.eq.s32.totalorder %s25, 0
      %p240 = por %p238, %p239
      %p241 = scmp.ne.s32.totalorder %s229, %s230
      %p242 = scmp.eq.s32.totalorder %s26, 3
      %p243 = por %p241, %p242
      %p245 = scmp.ne.s32.totalorder %s230, %s244
      %p246 = scmp.eq.s32.totalorder %s26, 0
      %p247 = por %p245, %p246
      %s249 = sadd.s32 %s248, 1
      %p252 = scmp.eq.s32.totalorder %s20, 3
      %p253 = scmp.ne.s32.totalorder %s248, %s250
      %p254 = scmp.eq.s32.totalorder %s20, 0
      %p255 = por %p253, %p254
      %p256 = scmp.ne.s32.totalorder %s248, %s250
      %p257 = scmp.eq.s32.totalorder %s25, 3
      %p258 = por %p256, %p257
      %p259 = scmp.ne.s32.totalorder %s250, %s251
      %p260 = scmp.eq.s32.totalorder %s25, 0
      %p261 = por %p259, %p260
      %p262 = scmp.ne.s32.totalorder %s250, %s251
      %p263 = scmp.eq.s32.totalorder %s26, 3
      %p264 = por %p262, %p263
      %p266 = scmp.ne.s32.totalorder %s251, %s265
      %p267 = scmp.eq.s32.totalorder %s26, 0
      %p268 = por %p266, %p267
      %s269 = ssub.s32 %s20, %s27
      %p270 = scmp.eq.s32.totalorder %s269, 0
      %s272 = sadd.s32 %s271, 1
      %s273 = scalar_select %p270, %s271, %s272
      %p276 = pneg %p270
      %p277 = scmp.eq.s32.totalorder %s20, 3
      %p278 = por %p276, %p277
      %p279 = scmp.ne.s32.totalorder %s271, %s274
      %p280 = scmp.eq.s32.totalorder %s20, 0
      %p281 = por %p279, %p280
      %p282 = scmp.ne.s32.totalorder %s271, %s274
      %p283 = scmp.eq.s32.totalorder %s25, 3
      %p284 = por %p282, %p283
      %p285 = scmp.ne.s32.totalorder %s274, %s275
      %p286 = scmp.eq.s32.totalorder %s25, 0
      %p287 = por %p285, %p286
      %p288 = scmp.ne.s32.totalorder %s274, %s275
      %p289 = scmp.eq.s32.totalorder %s26, 3
      %p290 = por %p288, %p289
      %p292 = scmp.ne.s32.totalorder %s275, %s291
      %p293 = scmp.eq.s32.totalorder %s26, 0
      %p294 = por %p292, %p293
      %p295 = scmp.le.s32.totalorder 1, %s20
      %p296 = scmp.lt.s32.totalorder %s20, 5
      %p297 = pnand %p295, %p296
      %p298 = pneg %p297
      // Predicated region
      $region9: #{bottleneck_forward.1} parent=5 // pred_check
        _
      $region10: #{bottleneck_forward.1} parent=5 // pred_check_branch
        %300 = sbr.rel (%p297) target = $region12
      $region11: #{bottleneck_forward.1} parent=5 // pred_region
        %s301 = ssub.s32 %s20, 1
        // Predicated region
        $region13: #{bottleneck_forward.1} parent=11 // pred_check
          %p302 = pneg %p93
        $region14: #{bottleneck_forward.1} parent=11 // pred_check_branch
          %304 = sbr.rel (%p302) target = $region16
        $region15: #{bottleneck_forward.1} parent=11 // pred_region
          _
        $region16: #{bottleneck_forward.1} parent=11 // pred_fallthru
          _
        // Predicated region
        $region17: #{bottleneck_forward.1} parent=11 // pred_check
          %p305 = pneg %p114
        $region18: #{bottleneck_forward.1} parent=11 // pred_check_branch
          %307 = sbr.rel (%p305) target = $region20
        $region19: #{bottleneck_forward.1} parent=11 // pred_region
          _
        $region20: #{bottleneck_forward.1} parent=11 // pred_fallthru
          _
        // Predicated region
        $region21: #{bottleneck_forward.1} parent=11 // pred_check
          %p308 = pneg %p135
        $region22: #{bottleneck_forward.1} parent=11 // pred_check_branch
          %310 = sbr.rel (%p308) target = $region24
        $region23: #{bottleneck_forward.1} parent=11 // pred_region
          _
        $region24: #{bottleneck_forward.1} parent=11 // pred_fallthru
          _
        // Predicated region
        $region25: #{bottleneck_forward.1} parent=11 // pred_check
          %p311 = pneg %p156
        $region26: #{bottleneck_forward.1} parent=11 // pred_check_branch
          %313 = sbr.rel (%p311) target = $region28
        $region27: #{bottleneck_forward.1} parent=11 // pred_region
          _
        $region28: #{bottleneck_forward.1} parent=11 // pred_fallthru
          _
        // Predicated region
        $region29: #{bottleneck_forward.1} parent=11 // pred_check
          %p314 = pneg %p177
        $region30: #{bottleneck_forward.1} parent=11 // pred_check_branch
          %316 = sbr.rel (%p314) target = $region32
        $region31: #{bottleneck_forward.1} parent=11 // pred_region
          _
        $region32: #{bottleneck_forward.1} parent=11 // pred_fallthru
          _
        // Predicated region
        $region33: #{bottleneck_forward.1} parent=11 // pred_check
          %p317 = pneg %p198
        $region34: #{bottleneck_forward.1} parent=11 // pred_check_branch
          %319 = sbr.rel (%p317) target = $region36
        $region35: #{bottleneck_forward.1} parent=11 // pred_region
          _
        $region36: #{bottleneck_forward.1} parent=11 // pred_fallthru
          _
        // Predicated region
        $region37: #{bottleneck_forward.1} parent=11 // pred_check
          %p320 = pneg %p219
        $region38: #{bottleneck_forward.1} parent=11 // pred_check_branch
          %322 = sbr.rel (%p320) target = $region40
        $region39: #{bottleneck_forward.1} parent=11 // pred_region
          _
        $region40: #{bottleneck_forward.1} parent=11 // pred_fallthru
          _
        // Predicated region
        $region41: #{bottleneck_forward.1} parent=11 // pred_check
          %p323 = pneg %p240
        $region42: #{bottleneck_forward.1} parent=11 // pred_check_branch
          %325 = sbr.rel (%p323) target = $region44
        $region43: #{bottleneck_forward.1} parent=11 // pred_region
          _
        $region44: #{bottleneck_forward.1} parent=11 // pred_fallthru
          _
        // Predicated region
        $region45: #{bottleneck_forward.1} parent=11 // pred_check
          %p326 = pneg %p261
        $region46: #{bottleneck_forward.1} parent=11 // pred_check_branch
          %328 = sbr.rel (%p326) target = $region48
        $region47: #{bottleneck_forward.1} parent=11 // pred_region
          _
        $region48: #{bottleneck_forward.1} parent=11 // pred_fallthru
          _
      $region12: #{bottleneck_forward.1} parent=5 // pred_fallthru
        _
      %p329 = scmp.lt.s32.totalorder %s20, 4
      // Predicated region
      $region49: #{bottleneck_forward.1} parent=5 // pred_check
        %p330 = pneg %p329
      $region50: #{bottleneck_forward.1} parent=5 // pred_check_branch
        %332 = sbr.rel (%p330) target = $region52
      $region51: #{bottleneck_forward.1} parent=5 // pred_region
        // Predicated region
        $region53: #{bottleneck_forward.1} parent=51 // pred_check
          %p333 = pneg %p40
        $region54: #{bottleneck_forward.1} parent=51 // pred_check_branch
          %335 = sbr.rel (%p333) target = $region56
        $region55: #{bottleneck_forward.1} parent=51 // pred_region
          %p336 = scmp.lt.s32.totalorder %s20, 3
          %s337 = scalar_select %p336, %s20, 3
          %s338 = smul.addr %s337, 20
          %s339 = smul.addr %s338, 4
          %s340 = scalar_lea.vmem %s0, %s339
        $region56: #{bottleneck_forward.1} parent=51 // pred_fallthru
          _
        // Predicated region
        $region57: #{bottleneck_forward.1} parent=51 // pred_check
          %p341 = pneg %p66
        $region58: #{bottleneck_forward.1} parent=51 // pred_check_branch
          %343 = sbr.rel (%p341) target = $region60
        $region59: #{bottleneck_forward.1} parent=51 // pred_region
          %p344 = scmp.lt.s32.totalorder %s20, 3
          %s345 = scalar_select %p344, %s20, 3
          %s346 = smul.addr %s345, 16
          %s347 = smul.addr %s346, 4
          %s348 = scalar_lea.vmem %s1, %s347
        $region60: #{bottleneck_forward.1} parent=51 // pred_fallthru
          _
      $region52: #{bottleneck_forward.1} parent=5 // pred_fallthru
        _
      %p349 = scmp.le.s32.totalorder 1, %s20
      %p350 = scmp.lt.s32.totalorder %s20, 5
      %p351 = pnand %p349, %p350
      %p352 = pneg %p351
      // Predicated region
      $region61: #{bottleneck_forward.1} parent=5 // pred_check
        _
      $region62: #{bottleneck_forward.1} parent=5 // pred_check_branch
        %354 = sbr.rel (%p351) target = $region64
      $region63: #{bottleneck_forward.1} parent=5 // pred_region
        %s355 = ssub.s32 %s20, 1
        %p356 = scmp.lt.s32.totalorder %s25, 3
        %s357 = scalar_select %p356, %s25, 3
        %s358 = smul.addr %s357, 20
        %s359 = smul.addr %s358, 4
        %s360 = scalar_lea.vmem %s0, %s359
        %p361 = pneg %p46
        %p362 = pneg %p43
        %p363 = scmp.lt.s32.totalorder %s25, 3
        %s364 = scalar_select %p363, %s25, 3
        %s365 = smul.addr %s364, 16
        %s366 = smul.addr %s365, 4
        %s367 = scalar_lea.vmem %s1, %s366
        %p368 = pneg %p72
        %p369 = pneg %p69
        %p370 = pneg %p93
        %p371 = pneg %p90
        %p372 = pneg %p114
        %p373 = pneg %p111
        %p374 = pneg %p135
        %p375 = pneg %p132
        %p376 = pneg %p156
        %p377 = pneg %p153
        %p378 = pneg %p177
        %p379 = pneg %p174
        %p380 = pneg %p198
        %p381 = pneg %p195
        %p382 = pneg %p219
        %p383 = pneg %p216
        %p384 = pneg %p240
        %p385 = pneg %p237
        %p386 = pneg %p261
        %p387 = pneg %p258
        %p388 = pneg %p287
        %p389 = pneg %p284
        %s390 = sand.u32 %s274, 1
        %s391 = scalar_lea.sflag [#allocation3], %s390
        %s392 = sand.u32 %s274, 1
        %s393 = smul.addr %s392, 128
        %s394 = scalar_lea.vmem [#allocation2], %s393
        %p395 = scmp.lt.s32.totalorder %s25, 3
        %s396 = scalar_select %p395, %s25, 3
        %s397 = smul.addr %s396, 20
        %s398 = smul.addr %s397, 4
        %s399 = scalar_lea.vmem %s0, %s398
        %p400 = scmp.lt.s32.totalorder %s25, 3
        %s401 = scalar_select %p400, %s25, 3
        %s402 = smul.addr %s401, 16
        %s403 = smul.addr %s402, 4
        %s404 = scalar_lea.vmem %s1, %s403
        %v406 = vld [vmem:[%s399] sm:$0xf]
        %v407 = vld [vmem:[%s399 + $0x4] sm:$0xf]
        %v408 = vld [vmem:[%s399 + $0x8] sm:$0xf]
        %v409 = vld [vmem:[%s399 + $0xc] sm:$0xf]
        %v410 = vld [vmem:[%s399 + $0x10] sm:$0xf]
        %v411 = vld [vmem:[%s399 + $0x14] sm:$0xf]
        %v412 = vld [vmem:[%s399 + $0x18] sm:$0xf]
        %v413 = vld [vmem:[%s399 + $0x1c] sm:$0xf]
        %v414 = vld [vmem:[%s399 + $0x20] sm:$0xf]
        %v415 = vld [vmem:[%s399 + $0x24] sm:$0xf]
        %v416 = vld [vmem:[%s399 + $0x28] sm:$0xf]
        %v417 = vld [vmem:[%s399 + $0x2c] sm:$0xf]
        %v418 = vld [vmem:[%s399 + $0x30] sm:$0xf]
        %v419 = vld [vmem:[%s399 + $0x34] sm:$0xf]
        %v420 = vld [vmem:[%s399 + $0x38] sm:$0xf]
        %v421 = vld [vmem:[%s399 + $0x3c] sm:$0xf]
        %v422 = vld [vmem:[%s399 + $0x40] sm:$0xf]
        %v423 = vld [vmem:[%s399 + $0x44] sm:$0xf]
        %v424 = vld [vmem:[%s399 + $0x48] sm:$0xf]
        %v425 = vld [vmem:[%s399 + $0x4c] sm:$0xf]
        %v426 = vld [vmem:[%s2] sm:$0xf]
        %v427 = vld [vmem:[%s2 + $0x4] sm:$0xf]
        %v428 = vld [vmem:[%s2 + $0x8] sm:$0xf]
        %v429 = vld [vmem:[%s2 + $0xc] sm:$0xf]
        %v430 = vld [vmem:[%s2 + $0x10] sm:$0xf]
        %v431 = vld [vmem:[%s2 + $0x14] sm:$0xf]
        %v432 = vld [vmem:[%s2 + $0x18] sm:$0xf]
        %v433 = vld [vmem:[%s2 + $0x1c] sm:$0xf]
        %v434 = vld [vmem:[%s2 + $0x20] sm:$0xf]
        %v435 = vld [vmem:[%s2 + $0x24] sm:$0xf]
        %v436 = vld [vmem:[%s2 + $0x28] sm:$0xf]
        %v437 = vld [vmem:[%s2 + $0x2c] sm:$0xf]
        %v438 = vld [vmem:[%s2 + $0x30] sm:$0xf]
        %v439 = vld [vmem:[%s2 + $0x34] sm:$0xf]
        %v440 = vld [vmem:[%s2 + $0x38] sm:$0xf]
        %v441 = vld [vmem:[%s2 + $0x3c] sm:$0xf]
        %v462 = vunpack.c.l.b16 %v406
        %v463 = vunpack.c.l.b16 %v407
        %v464 = vunpack.c.l.b16 %v408
        %v465 = vunpack.c.l.b16 %v409
        %v466 = vunpack.c.l.b16 %v410
        %v467 = vunpack.c.l.b16 %v411
        %v468 = vunpack.c.l.b16 %v412
        %v469 = vunpack.c.l.b16 %v413
        %v470 = vunpack.c.l.b16 %v414
        %v471 = vunpack.c.l.b16 %v415
        %v472 = vunpack.c.l.b16 %v416
        %v473 = vunpack.c.l.b16 %v417
        %v474 = vunpack.c.l.b16 %v418
        %v475 = vunpack.c.l.b16 %v419
        %v476 = vunpack.c.l.b16 %v420
        %v477 = vunpack.c.l.b16 %v421
        %v478 = vunpack.c.l.b16 %v422
        %v479 = vunpack.c.l.b16 %v423
        %v480 = vunpack.c.l.b16 %v424
        %v481 = vunpack.c.l.b16 %v425
        %v482 = vpack.c.b16 %v463, %v462
        %v483 = vpack.c.b16 %v465, %v464
        %v484 = vpack.c.b16 %v467, %v466
        %v485 = vpack.c.b16 %v469, %v468
        %v486 = vpack.c.b16 %v471, %v470
        %v487 = vpack.c.b16 %v473, %v472
        %v488 = vpack.c.b16 %v475, %v474
        %v489 = vpack.c.b16 %v477, %v476
        %v490 = vpack.c.b16 %v479, %v478
        %v491 = vpack.c.b16 %v481, %v480
        %v518 = vunpack.c.l.b16 %v426
        %v519 = vunpack.c.l.b16 %v427
        %v520 = vunpack.c.l.b16 %v428
        %v521 = vunpack.c.l.b16 %v429
        %v522 = vunpack.c.l.b16 %v430
        %v523 = vunpack.c.l.b16 %v431
        %v524 = vunpack.c.l.b16 %v432
        %v525 = vunpack.c.l.b16 %v433
        %v526 = vunpack.c.l.b16 %v434
        %v527 = vunpack.c.l.b16 %v435
        %v528 = vunpack.c.l.b16 %v436
        %v529 = vunpack.c.l.b16 %v437
        %v530 = vunpack.c.l.b16 %v438
        %v531 = vunpack.c.l.b16 %v439
        %v532 = vunpack.c.l.b16 %v440
        %v533 = vunpack.c.l.b16 %v441
        %v534 = vpack.c.b16 %v519, %v518
        %v535 = vpack.c.b16 %v521, %v520
        %v536 = vpack.c.b16 %v523, %v522
        %v537 = vpack.c.b16 %v525, %v524
        %v538 = vpack.c.b16 %v527, %v526
        %v539 = vpack.c.b16 %v529, %v528
        %v540 = vpack.c.b16 %v531, %v530
        %v541 = vpack.c.b16 %v533, %v532
        %550 = vmatprep.subr.bf16.mxu0 0
        %551 = vmatpush1.bf16.msra.mxu0 %v534
        %552 = vmatprep.subr.bf16.mxu0 0
        %553 = vmatpush1.bf16.msra.mxu0 %v535
        %554 = vmatprep.subr.bf16.mxu0 0
        %555 = vmatpush1.bf16.msra.mxu0 %v536
        %556 = vmatprep.subr.bf16.mxu0 0
        %557 = vmatpush1.bf16.msra.mxu0 %v537
        %558 = vmatprep.subr.bf16.mxu0 0
        %559 = vmatpush1.bf16.msra.mxu0 %v538
        %560 = vmatprep.subr.bf16.mxu0 0
        %561 = vmatpush1.bf16.msra.mxu0 %v539
        %562 = vmatprep.subr.bf16.mxu0 0
        %563 = vmatpush1.bf16.msra.mxu0 %v540
        %564 = vmatprep.subr.bf16.mxu0 0
        %565 = vmatpush1.bf16.msra.mxu0 %v541
        %566 = vmatprep.subr.bf16.mxu0 0
        %567 = vmatpush1.bf16.msra.mxu0 0
        %568 = vmatprep.subr.bf16.mxu0 0
        %569 = vmatpush1.bf16.msra.mxu0 0
        %570 = vmatprep.subr.bf16.mxu0 0
        %571 = vmatpush1.bf16.msra.mxu0 0
        %572 = vmatprep.subr.bf16.mxu0 0
        %573 = vmatpush1.bf16.msra.mxu0 0
        %574 = vmatprep.subr.bf16.mxu0 0
        %575 = vmatpush1.bf16.msra.mxu0 0
        %576 = vmatprep.subr.bf16.mxu0 0
        %577 = vmatpush1.bf16.msra.mxu0 0
        %578 = vmatprep.subr.bf16.mxu0 0
        %579 = vmatpush1.bf16.msra.mxu0 0
        %580 = vmatprep.subr.bf16.mxu0 0
        %581 = vmatpush1.bf16.msra.mxu0 0
        %582 = vmatprep.mubr.bf16.mxu0 0
        %583 = vmatmul.mubr.bf16.gmra.mrb[0].mxu0 %v482
        %v584 = vpop.f32.mrb[0].mxu0
        %v585 = vadd.f32 0.0, %v584
        %v586 = vpop.f32.mrb[0].mxu0
        %v587 = vpop.f32.mrb[0].mxu0
        %v588 = vadd.f32 0.0, %v587
        %v589 = vpop.f32.mrb[0].mxu0
        %590 = vmatprep.mubr.bf16.mxu0 0
        %591 = vmatmul.mubr.bf16.gmra.mrb[0].mxu0 %v483
        %v592 = vpop.f32.mrb[0].mxu0
        %v593 = vadd.f32 0.0, %v592
        %v594 = vpop.f32.mrb[0].mxu0
        %v595 = vpop.f32.mrb[0].mxu0
        %v596 = vadd.f32 0.0, %v595
        %v597 = vpop.f32.mrb[0].mxu0
        %598 = vmatprep.mubr.bf16.mxu0 0
        %599 = vmatmul.mubr.bf16.gmra.mrb[0].mxu0 %v484
        %v600 = vpop.f32.mrb[0].mxu0
        %v601 = vadd.f32 0.0, %v600
        %v602 = vpop.f32.mrb[0].mxu0
        %v603 = vpop.f32.mrb[0].mxu0
        %v604 = vadd.f32 0.0, %v603
        %v605 = vpop.f32.mrb[0].mxu0
        %606 = vmatprep.mubr.bf16.mxu0 0
        %607 = vmatmul.mubr.bf16.gmra.mrb[0].mxu0 %v485
        %v608 = vpop.f32.mrb[0].mxu0
        %v609 = vadd.f32 0.0, %v608
        %v610 = vpop.f32.mrb[0].mxu0
        %v611 = vpop.f32.mrb[0].mxu0
        %v612 = vadd.f32 0.0, %v611
        %v613 = vpop.f32.mrb[0].mxu0
        %614 = vmatprep.mubr.bf16.mxu0 0
        %615 = vmatmul.mubr.bf16.gmra.mrb[0].mxu0 %v486
        %v616 = vpop.f32.mrb[0].mxu0
        %v617 = vadd.f32 0.0, %v616
        %v618 = vpop.f32.mrb[0].mxu0
        %v619 = vpop.f32.mrb[0].mxu0
        %v620 = vadd.f32 0.0, %v619
        %v621 = vpop.f32.mrb[0].mxu0
        %622 = vmatprep.mubr.bf16.mxu0 0
        %623 = vmatmul.mubr.bf16.gmra.mrb[0].mxu0 %v487
        %v624 = vpop.f32.mrb[0].mxu0
        %v625 = vadd.f32 0.0, %v624
        %v626 = vpop.f32.mrb[0].mxu0
        %v627 = vpop.f32.mrb[0].mxu0
        %v628 = vadd.f32 0.0, %v627
        %v629 = vpop.f32.mrb[0].mxu0
        %630 = vmatprep.mubr.bf16.mxu0 0
        %631 = vmatmul.mubr.bf16.gmra.mrb[0].mxu0 %v488
        %v632 = vpop.f32.mrb[0].mxu0
        %v633 = vadd.f32 0.0, %v632
        %v634 = vpop.f32.mrb[0].mxu0
        %v635 = vpop.f32.mrb[0].mxu0
        %v636 = vadd.f32 0.0, %v635
        %v637 = vpop.f32.mrb[0].mxu0
        %638 = vmatprep.mubr.bf16.mxu0 0
        %639 = vmatmul.mubr.bf16.gmra.mrb[0].mxu0 %v489
        %v640 = vpop.f32.mrb[0].mxu0
        %v641 = vadd.f32 0.0, %v640
        %v642 = vpop.f32.mrb[0].mxu0
        %v643 = vpop.f32.mrb[0].mxu0
        %v644 = vadd.f32 0.0, %v643
        %v645 = vpop.f32.mrb[0].mxu0
        %646 = vmatprep.mubr.bf16.mxu0 0
        %647 = vmatmul.mubr.bf16.gmra.mrb[0].mxu0 %v490
        %v648 = vpop.f32.mrb[0].mxu0
        %v649 = vadd.f32 0.0, %v648
        %v650 = vpop.f32.mrb[0].mxu0
        %v651 = vpop.f32.mrb[0].mxu0
        %v652 = vadd.f32 0.0, %v651
        %v653 = vpop.f32.mrb[0].mxu0
        %654 = vmatprep.mubr.bf16.mxu0 0
        %655 = vmatmul.mubr.bf16.gmra.mrb[0].mxu0 %v491
        %v656 = vpop.f32.mrb[0].mxu0
        %v657 = vadd.f32 0.0, %v656
        %v658 = vpop.f32.mrb[0].mxu0
        %v659 = vpop.f32.mrb[0].mxu0
        %v660 = vadd.f32 0.0, %v659
        %v661 = vpop.f32.mrb[0].mxu0
        %662 = vdwg.mxu0
        %v663 = vld [vmem:[%s3] sm:$0x1]
        %v665 = vlaneseq
        %v666 = vshrl.u32 %v665, 7
        %v667 = vsub.s32 0, %v666
        %v668 = vrot.slane %v663, %v667
        %v670 = vmul.f32 %v585, %v668
        %v671 = vmul.f32 %v588, %v668
        %v672 = vmul.f32 %v593, %v668
        %v673 = vmul.f32 %v596, %v668
        %v674 = vmul.f32 %v601, %v668
        %v675 = vmul.f32 %v604, %v668
        %v676 = vmul.f32 %v609, %v668
        %v677 = vmul.f32 %v612, %v668
        %v678 = vmul.f32 %v617, %v668
        %v679 = vmul.f32 %v620, %v668
        %v680 = vmul.f32 %v625, %v668
        %v681 = vmul.f32 %v628, %v668
        %v682 = vmul.f32 %v633, %v668
        %v683 = vmul.f32 %v636, %v668
        %v684 = vmul.f32 %v641, %v668
        %v685 = vmul.f32 %v644, %v668
        %v686 = vmul.f32 %v649, %v668
        %v687 = vmul.f32 %v652, %v668
        %v688 = vmul.f32 %v657, %v668
        %v689 = vmul.f32 %v660, %v668
        %v690 = vld [vmem:[%s4] sm:$0x1]
        %v692 = vlaneseq
        %v693 = vshrl.u32 %v692, 7
        %v694 = vsub.s32 0, %v693
        %v695 = vrot.slane %v690, %v694
        %v697 = vadd.f32 %v670, %v695
        %v698 = vadd.f32 %v671, %v695
        %v699 = vadd.f32 %v672, %v695
        %v700 = vadd.f32 %v673, %v695
        %v701 = vadd.f32 %v674, %v695
        %v702 = vadd.f32 %v675, %v695
        %v703 = vadd.f32 %v676, %v695
        %v704 = vadd.f32 %v677, %v695
        %v705 = vadd.f32 %v678, %v695
        %v706 = vadd.f32 %v679, %v695
        %v707 = vadd.f32 %v680, %v695
        %v708 = vadd.f32 %v681, %v695
        %v709 = vadd.f32 %v682, %v695
        %v710 = vadd.f32 %v683, %v695
        %v711 = vadd.f32 %v684, %v695
        %v712 = vadd.f32 %v685, %v695
        %v713 = vadd.f32 %v686, %v695
        %v714 = vadd.f32 %v687, %v695
        %v715 = vadd.f32 %v688, %v695
        %v716 = vadd.f32 %v689, %v695
        %v717 = vmax.f32 %v697, 0.0
        %v718 = vmax.f32 %v698, 0.0
        %v719 = vmax.f32 %v699, 0.0
        %v720 = vmax.f32 %v700, 0.0
        %v721 = vmax.f32 %v701, 0.0
        %v722 = vmax.f32 %v702, 0.0
        %v723 = vmax.f32 %v703, 0.0
        %v724 = vmax.f32 %v704, 0.0
        %v725 = vmax.f32 %v705, 0.0
        %v726 = vmax.f32 %v706, 0.0
        %v727 = vmax.f32 %v707, 0.0
        %v728 = vmax.f32 %v708, 0.0
        %v729 = vmax.f32 %v709, 0.0
        %v730 = vmax.f32 %v710, 0.0
        %v731 = vmax.f32 %v711, 0.0
        %v732 = vmax.f32 %v712, 0.0
        %v733 = vmax.f32 %v713, 0.0
        %v734 = vmax.f32 %v714, 0.0
        %v735 = vmax.f32 %v715, 0.0
        %v736 = vmax.f32 %v716, 0.0
        %p737 = scmp.lt.s32.totalorder %s25, 0
        %s738 = ssub.s32 0, %s25
        %s739 = scalar_select %p737, %s738, %s25
        %s740 = sand.u32 %s739, 1
        %s741 = ssub.s32 0, %s740
        %s742 = scalar_select %p737, %s741, %s740
        %p743 = scmp.ne.s32.totalorder %s742, 0
        %p744 = scmp.lt.s32.totalorder %s742, 0
        %p745 = pnand %p744, %p743
        %p746 = pneg %p745
        %s747 = sadd.s32 %s742, 2
        %s748 = scalar_select %p746, %s747, %s742
        %s749 = smul.u32 %s748, 8
        %v750 = vstv %s749
        %v751 = vadd.s32 %v750, 1
        %v752 = vadd.s32 %v750, 2
        %v753 = vadd.s32 %v750, 3
        %v754 = vadd.s32 %v750, 4
        %v755 = vadd.s32 %v750, 5
        %v756 = vadd.s32 %v750, 6
        %v757 = vadd.s32 %v750, 7
        %v758 = vadd.s32 %v750, 8
        %v759 = vadd.s32 %v750, 9
        %vm760 = vcmp.ge.s32.totalorder %v750, 1
        %vm761 = vcmp.ge.s32.totalorder %v751, 1
        %vm762 = vcmp.ge.s32.totalorder %v752, 1
        %vm763 = vcmp.ge.s32.totalorder %v753, 1
        %vm764 = vcmp.ge.s32.totalorder %v754, 1
        %vm765 = vcmp.ge.s32.totalorder %v755, 1
        %vm766 = vcmp.ge.s32.totalorder %v756, 1
        %vm767 = vcmp.ge.s32.totalorder %v757, 1
        %vm768 = vcmp.ge.s32.totalorder %v758, 1
        %vm769 = vcmp.ge.s32.totalorder %v759, 1
        %vm770 = vcmp.le.s32.totalorder %v750, 16
        %vm771 = vcmp.le.s32.totalorder %v751, 16
        %vm772 = vcmp.le.s32.totalorder %v752, 16
        %vm773 = vcmp.le.s32.totalorder %v753, 16
        %vm774 = vcmp.le.s32.totalorder %v754, 16
        %vm775 = vcmp.le.s32.totalorder %v755, 16
        %vm776 = vcmp.le.s32.totalorder %v756, 16
        %vm777 = vcmp.le.s32.totalorder %v757, 16
        %vm778 = vcmp.le.s32.totalorder %v758, 16
        %vm779 = vcmp.le.s32.totalorder %v759, 16
        %vm780 = vmand %vm760, %vm770
        %vm781 = vmand %vm761, %vm771
        %vm782 = vmand %vm762, %vm772
        %vm783 = vmand %vm763, %vm773
        %vm784 = vmand %vm764, %vm774
        %vm785 = vmand %vm765, %vm775
        %vm786 = vmand %vm766, %vm776
        %vm787 = vmand %vm767, %vm777
        %vm788 = vmand %vm768, %vm778
        %vm789 = vmand %vm769, %vm779
        %v790 = vsel %vm780, 1, 0
        %v791 = vsel %vm781, 1, 0
        %v792 = vsel %vm782, 1, 0
        %v793 = vsel %vm783, 1, 0
        %v794 = vsel %vm784, 1, 0
        %v795 = vsel %vm785, 1, 0
        %v796 = vsel %vm786, 1, 0
        %v797 = vsel %vm787, 1, 0
        %v798 = vsel %vm788, 1, 0
        %v799 = vsel %vm789, 1, 0
        %vm800 = vcmp.eq.s32.totalorder %v790, 1
        %vm801 = vcmp.eq.s32.totalorder %v791, 1
        %vm802 = vcmp.eq.s32.totalorder %v792, 1
        %vm803 = vcmp.eq.s32.totalorder %v793, 1
        %vm804 = vcmp.eq.s32.totalorder %v794, 1
        %vm805 = vcmp.eq.s32.totalorder %v795, 1
        %vm806 = vcmp.eq.s32.totalorder %v796, 1
        %vm807 = vcmp.eq.s32.totalorder %v797, 1
        %vm808 = vcmp.eq.s32.totalorder %v798, 1
        %vm809 = vcmp.eq.s32.totalorder %v799, 1
        %v810 = vsel %vm800, %v717, 0.0
        %v811 = vsel %vm800, %v718, 0.0
        %v812 = vsel %vm801, %v719, 0.0
        %v813 = vsel %vm801, %v720, 0.0
        %v814 = vsel %vm802, %v721, 0.0
        %v815 = vsel %vm802, %v722, 0.0
        %v816 = vsel %vm803, %v723, 0.0
        %v817 = vsel %vm803, %v724, 0.0
        %v818 = vsel %vm804, %v725, 0.0
        %v819 = vsel %vm804, %v726, 0.0
        %v820 = vsel %vm805, %v727, 0.0
        %v821 = vsel %vm805, %v728, 0.0
        %v822 = vsel %vm806, %v729, 0.0
        %v823 = vsel %vm806, %v730, 0.0
        %v824 = vsel %vm807, %v731, 0.0
        %v825 = vsel %vm807, %v732, 0.0
        %v826 = vsel %vm808, %v733, 0.0
        %v827 = vsel %vm808, %v734, 0.0
        %v828 = vsel %vm809, %v735, 0.0
        %v829 = vsel %vm809, %v736, 0.0
        %v830 = vpack.c.bf16 %v811, %v810
        %v831 = vpack.c.bf16 %v813, %v812
        %v832 = vpack.c.bf16 %v815, %v814
        %v833 = vpack.c.bf16 %v817, %v816
        %v834 = vpack.c.bf16 %v819, %v818
        %v835 = vpack.c.bf16 %v821, %v820
        %v836 = vpack.c.bf16 %v823, %v822
        %v837 = vpack.c.bf16 %v825, %v824
        %v838 = vpack.c.bf16 %v827, %v826
        %v839 = vpack.c.bf16 %v829, %v828
        %v841 = vshrl.u32 %v830, 16
        %v843 = vrot.slane %v841, 7
        %v844 = vshll.u32 %v830, 16
        %v846 = vor.u32 %v843, %v844
        %v848 = vshrl.u32 %v831, 16
        %v850 = vrot.slane %v848, 7
        %v851 = vshll.u32 %v831, 16
        %v853 = vor.u32 %v850, %v851
        %v855 = vshrl.u32 %v832, 16
        %v857 = vrot.slane %v855, 7
        %v858 = vshll.u32 %v832, 16
        %v860 = vor.u32 %v857, %v858
        %v862 = vshrl.u32 %v833, 16
        %v864 = vrot.slane %v862, 7
        %v865 = vshll.u32 %v833, 16
        %v867 = vor.u32 %v864, %v865
        %v869 = vshrl.u32 %v834, 16
        %v871 = vrot.slane %v869, 7
        %v872 = vshll.u32 %v834, 16
        %v874 = vor.u32 %v871, %v872
        %v876 = vshrl.u32 %v835, 16
        %v878 = vrot.slane %v876, 7
        %v879 = vshll.u32 %v835, 16
        %v881 = vor.u32 %v878, %v879
        %v883 = vshrl.u32 %v836, 16
        %v885 = vrot.slane %v883, 7
        %v886 = vshll.u32 %v836, 16
        %v888 = vor.u32 %v885, %v886
        %v890 = vshrl.u32 %v837, 16
        %v892 = vrot.slane %v890, 7
        %v893 = vshll.u32 %v837, 16
        %v895 = vor.u32 %v892, %v893
        %v897 = vshrl.u32 %v838, 16
        %v899 = vrot.slane %v897, 7
        %v900 = vshll.u32 %v838, 16
        %v902 = vor.u32 %v899, %v900
        %v904 = vshrl.u32 %v839, 16
        %v906 = vrot.slane %v904, 7
        %v907 = vshll.u32 %v839, 16
        %v909 = vor.u32 %v906, %v907
        %vm930 = vcmask 1040384
        %vm931 = vsmask.f32 256
        %vm932 = vmand %vm930, %vm931
        %v933 = vsel %vm932, 0, %v846
        %v934 = vsel %vm932, 0, %v853
        %v935 = vsel %vm932, 0, %v860
        %v936 = vsel %vm932, 0, %v867
        %v937 = vsel %vm932, 0, %v874
        %v938 = vsel %vm932, 0, %v881
        %v939 = vsel %vm932, 0, %v888
        %v940 = vsel %vm932, 0, %v895
        %v941 = vsel %vm932, 0, %v902
        %v942 = vsel %vm932, 0, %v909
        %v943 = vsel %vm932, %v843, 0
        %v944 = vsel %vm932, %v850, 0
        %v945 = vsel %vm932, %v857, 0
        %v946 = vsel %vm932, %v864, 0
        %v947 = vsel %vm932, %v871, 0
        %v948 = vsel %vm932, %v878, 0
        %v949 = vsel %vm932, %v885, 0
        %v950 = vsel %vm932, %v892, 0
        %v951 = vsel %vm932, %v899, 0
        %v952 = vsel %vm932, %v906, 0
        %vm953 = vsmask.f32 7424
        %v955 = vshrl.u32 %v933, 16
        %v957 = vshll.u32 %v933, 16
        %v959 = vrot.slane %v957, 1
        %v960 = vor.u32 %v955, %v959
        %v962 = vshll.u32 %v943, 16
        %v964 = vrot.slane %v962, 1
        %v965 = vsel %vm953, %v960, %v964
        %v967 = vshrl.u32 %v934, 16
        %v969 = vshll.u32 %v934, 16
        %v971 = vrot.slane %v969, 1
        %v972 = vor.u32 %v967, %v971
        %v974 = vshll.u32 %v944, 16
        %v976 = vrot.slane %v974, 1
        %v977 = vsel %vm953, %v972, %v976
        %v979 = vshrl.u32 %v935, 16
        %v981 = vshll.u32 %v935, 16
        %v983 = vrot.slane %v981, 1
        %v984 = vor.u32 %v979, %v983
        %v986 = vshll.u32 %v945, 16
        %v988 = vrot.slane %v986, 1
        %v989 = vsel %vm953, %v984, %v988
        %v991 = vshrl.u32 %v936, 16
        %v993 = vshll.u32 %v936, 16
        %v995 = vrot.slane %v993, 1
        %v996 = vor.u32 %v991, %v995
        %v998 = vshll.u32 %v946, 16
        %v1000 = vrot.slane %v998, 1
        %v1001 = vsel %vm953, %v996, %v1000
        %v1003 = vshrl.u32 %v937, 16
        %v1005 = vshll.u32 %v937, 16
        %v1007 = vrot.slane %v1005, 1
        %v1008 = vor.u32 %v1003, %v1007
        %v1010 = vshll.u32 %v947, 16
        %v1012 = vrot.slane %v1010, 1
        %v1013 = vsel %vm953, %v1008, %v1012
        %v1015 = vshrl.u32 %v938, 16
        %v1017 = vshll.u32 %v938, 16
        %v1019 = vrot.slane %v1017, 1
        %v1020 = vor.u32 %v1015, %v1019
        %v1022 = vshll.u32 %v948, 16
        %v1024 = vrot.slane %v1022, 1
        %v1025 = vsel %vm953, %v1020, %v1024
        %v1027 = vshrl.u32 %v939, 16
        %v1029 = vshll.u32 %v939, 16
        %v1031 = vrot.slane %v1029, 1
        %v1032 = vor.u32 %v1027, %v1031
        %v1034 = vshll.u32 %v949, 16
        %v1036 = vrot.slane %v1034, 1
        %v1037 = vsel %vm953, %v1032, %v1036
        %v1039 = vshrl.u32 %v940, 16
        %v1041 = vshll.u32 %v940, 16
        %v1043 = vrot.slane %v1041, 1
        %v1044 = vor.u32 %v1039, %v1043
        %v1046 = vshll.u32 %v950, 16
        %v1048 = vrot.slane %v1046, 1
        %v1049 = vsel %vm953, %v1044, %v1048
        %vm1066 = vcmask 1046528
        %v1067 = vrot.slane %v933, 1
        %v1068 = vrot.slane %v943, 1
        %v1069 = vsel %vm1066, %v1067, %v1068
        %v1070 = vrot.slane %v934, 1
        %v1071 = vrot.slane %v944, 1
        %v1072 = vsel %vm1066, %v1070, %v1071
        %v1073 = vrot.slane %v935, 1
        %v1074 = vrot.slane %v945, 1
        %v1075 = vsel %vm1066, %v1073, %v1074
        %v1076 = vrot.slane %v936, 1
        %v1077 = vrot.slane %v946, 1
        %v1078 = vsel %vm1066, %v1076, %v1077
        %v1079 = vrot.slane %v937, 1
        %v1080 = vrot.slane %v947, 1
        %v1081 = vsel %vm1066, %v1079, %v1080
        %v1082 = vrot.slane %v938, 1
        %v1083 = vrot.slane %v948, 1
        %v1084 = vsel %vm1066, %v1082, %v1083
        %v1085 = vrot.slane %v939, 1
        %v1086 = vrot.slane %v949, 1
        %v1087 = vsel %vm1066, %v1085, %v1086
        %v1088 = vrot.slane %v940, 1
        %v1089 = vrot.slane %v950, 1
        %v1090 = vsel %vm1066, %v1088, %v1089
        %v1092 = vshrl.u32 %v941, 16
        %v1094 = vshll.u32 %v941, 16
        %v1096 = vrot.slane %v1094, 1
        %v1097 = vor.u32 %v1092, %v1096
        %v1099 = vshll.u32 %v951, 16
        %v1101 = vrot.slane %v1099, 1
        %v1102 = vsel %vm953, %v1097, %v1101
        %v1105 = vrot.slane %v941, 1
        %v1106 = vrot.slane %v951, 1
        %v1107 = vsel %vm1066, %v1105, %v1106
        %v1109 = vshrl.u32 %v942, 16
        %v1111 = vshll.u32 %v942, 16
        %v1113 = vrot.slane %v1111, 1
        %v1114 = vor.u32 %v1109, %v1113
        %v1116 = vshll.u32 %v952, 16
        %v1118 = vrot.slane %v1116, 1
        %v1119 = vsel %vm953, %v1114, %v1118
        %v1122 = vrot.slane %v942, 1
        %v1123 = vrot.slane %v952, 1
        %v1124 = vsel %vm1066, %v1122, %v1123
        %1125 = vrot.lane.b32.xlu0 %v965, 32
        %v1126 = vpop.permute.xlu0 %1125
        %1127 = vrot.lane.b32.xlu0 %v977, 32
        %v1128 = vpop.permute.xlu0 %1127
        %1129 = vrot.lane.b32.xlu0 %v989, 32
        %v1130 = vpop.permute.xlu0 %1129
        %1131 = vrot.lane.b32.xlu0 %v1001, 32
        %v1132 = vpop.permute.xlu0 %1131
        %1133 = vrot.lane.b32.xlu0 %v1013, 32
        %v1134 = vpop.permute.xlu0 %1133
        %1135 = vrot.lane.b32.xlu0 %v1025, 32
        %v1136 = vpop.permute.xlu0 %1135
        %1137 = vrot.lane.b32.xlu0 %v1037, 32
        %v1138 = vpop.permute.xlu0 %1137
        %1139 = vrot.lane.b32.xlu0 %v1049, 32
        %v1140 = vpop.permute.xlu0 %1139
        %1141 = vrot.lane.b32.xlu0 %v1069, 64
        %v1142 = vpop.permute.xlu0 %1141
        %1143 = vrot.lane.b32.xlu0 %v1072, 64
        %v1144 = vpop.permute.xlu0 %1143
        %1145 = vrot.lane.b32.xlu0 %v1075, 64
        %v1146 = vpop.permute.xlu0 %1145
        %1147 = vrot.lane.b32.xlu0 %v1078, 64
        %v1148 = vpop.permute.xlu0 %1147
        %1149 = vrot.lane.b32.xlu0 %v1081, 64
        %v1150 = vpop.permute.xlu0 %1149
        %1151 = vrot.lane.b32.xlu0 %v1084, 64
        %v1152 = vpop.permute.xlu0 %1151
        %1153 = vrot.lane.b32.xlu0 %v1087, 64
        %v1154 = vpop.permute.xlu0 %1153
        %1155 = vrot.lane.b32.xlu0 %v1090, 64
        %v1156 = vpop.permute.xlu0 %1155
        %1157 = vrot.lane.b32.xlu0 %v934, 96
        %v1158 = vpop.permute.xlu0 %1157
        %1159 = vrot.lane.b32.xlu0 %v935, 96
        %v1160 = vpop.permute.xlu0 %1159
        %1161 = vrot.lane.b32.xlu0 %v936, 96
        %v1162 = vpop.permute.xlu0 %1161
        %1163 = vrot.lane.b32.xlu0 %v937, 96
        %v1164 = vpop.permute.xlu0 %1163
        %1165 = vrot.lane.b32.xlu0 %v938, 96
        %v1166 = vpop.permute.xlu0 %1165
        %1167 = vrot.lane.b32.xlu0 %v939, 96
        %v1168 = vpop.permute.xlu0 %1167
        %1169 = vrot.lane.b32.xlu0 %v940, 96
        %v1170 = vpop.permute.xlu0 %1169
        %1171 = vrot.lane.b32.xlu0 %v941, 96
        %v1172 = vpop.permute.xlu0 %1171
        %1173 = vrot.lane.b32.xlu0 %v1072, 32
        %v1174 = vpop.permute.xlu0 %1173
        %1175 = vrot.lane.b32.xlu0 %v1075, 32
        %v1176 = vpop.permute.xlu0 %1175
        %1177 = vrot.lane.b32.xlu0 %v1078, 32
        %v1178 = vpop.permute.xlu0 %1177
        %1179 = vrot.lane.b32.xlu0 %v1081, 32
        %v1180 = vpop.permute.xlu0 %1179
        %1181 = vrot.lane.b32.xlu0 %v1084, 32
        %v1182 = vpop.permute.xlu0 %1181
        %1183 = vrot.lane.b32.xlu0 %v1087, 32
        %v1184 = vpop.permute.xlu0 %1183
        %1185 = vrot.lane.b32.xlu0 %v1090, 32
        %v1186 = vpop.permute.xlu0 %1185
        %1187 = vrot.lane.b32.xlu0 %v1107, 32
        %v1188 = vpop.permute.xlu0 %1187
        %1189 = vrot.lane.b32.xlu0 %v935, 64
        %v1190 = vpop.permute.xlu0 %1189
        %1191 = vrot.lane.b32.xlu0 %v936, 64
        %v1192 = vpop.permute.xlu0 %1191
        %1193 = vrot.lane.b32.xlu0 %v937, 64
        %v1194 = vpop.permute.xlu0 %1193
        %1195 = vrot.lane.b32.xlu0 %v938, 64
        %v1196 = vpop.permute.xlu0 %1195
        %1197 = vrot.lane.b32.xlu0 %v939, 64
        %v1198 = vpop.permute.xlu0 %1197
        %1199 = vrot.lane.b32.xlu0 %v940, 64
        %v1200 = vpop.permute.xlu0 %1199
        %1201 = vrot.lane.b32.xlu0 %v941, 64
        %v1202 = vpop.permute.xlu0 %1201
        %1203 = vrot.lane.b32.xlu0 %v942, 64
        %v1204 = vpop.permute.xlu0 %1203
        %1205 = vrot.lane.b32.xlu0 %v989, 96
        %v1206 = vpop.permute.xlu0 %1205
        %1207 = vrot.lane.b32.xlu0 %v1001, 96
        %v1208 = vpop.permute.xlu0 %1207
        %1209 = vrot.lane.b32.xlu0 %v1013, 96
        %v1210 = vpop.permute.xlu0 %1209
        %1211 = vrot.lane.b32.xlu0 %v1025, 96
        %v1212 = vpop.permute.xlu0 %1211
        %1213 = vrot.lane.b32.xlu0 %v1037, 96
        %v1214 = vpop.permute.xlu0 %1213
        %1215 = vrot.lane.b32.xlu0 %v1049, 96
        %v1216 = vpop.permute.xlu0 %1215
        %1217 = vrot.lane.b32.xlu0 %v1102, 96
        %v1218 = vpop.permute.xlu0 %1217
        %1219 = vrot.lane.b32.xlu0 %v1119, 96
        %v1220 = vpop.permute.xlu0 %1219
        %vm1221 = vcmask 261120
        %v1223 = vsel %vm1221, %v933, %v1126
        %v1225 = vsel %vm1221, %v934, %v1128
        %v1227 = vsel %vm1221, %v935, %v1130
        %v1229 = vsel %vm1221, %v936, %v1132
        %v1231 = vsel %vm1221, %v937, %v1134
        %v1233 = vsel %vm1221, %v938, %v1136
        %v1235 = vsel %vm1221, %v939, %v1138
        %v1237 = vsel %vm1221, %v940, %v1140
        %vm1238 = vcmask 523264
        %v1240 = vsel %vm1238, %v1223, %v1142
        %v1242 = vsel %vm1238, %v1225, %v1144
        %v1244 = vsel %vm1238, %v1227, %v1146
        %v1246 = vsel %vm1238, %v1229, %v1148
        %v1248 = vsel %vm1238, %v1231, %v1150
        %v1250 = vsel %vm1238, %v1233, %v1152
        %v1252 = vsel %vm1238, %v1235, %v1154
        %v1254 = vsel %vm1238, %v1237, %v1156
        %vm1255 = vcmask 785408
        %v1257 = vsel %vm1255, %v1240, %v1158
        %v1260 = vsel %vm1255, %v1242, %v1160
        %v1263 = vsel %vm1255, %v1244, %v1162
        %v1266 = vsel %vm1255, %v1246, %v1164
        %v1269 = vsel %vm1255, %v1248, %v1166
        %v1272 = vsel %vm1255, %v1250, %v1168
        %v1275 = vsel %vm1255, %v1252, %v1170
        %v1278 = vsel %vm1255, %v1254, %v1172
        %v1282 = vsel %vm1221, %v977, %v1174
        %v1285 = vsel %vm1221, %v989, %v1176
        %v1288 = vsel %vm1221, %v1001, %v1178
        %v1291 = vsel %vm1221, %v1013, %v1180
        %v1294 = vsel %vm1221, %v1025, %v1182
        %v1297 = vsel %vm1221, %v1037, %v1184
        %v1300 = vsel %vm1221, %v1049, %v1186
        %v1303 = vsel %vm1221, %v1102, %v1188
        %v1305 = vsel %vm1238, %v1282, %v1190
        %v1307 = vsel %vm1238, %v1285, %v1192
        %v1309 = vsel %vm1238, %v1288, %v1194
        %v1311 = vsel %vm1238, %v1291, %v1196
        %v1313 = vsel %vm1238, %v1294, %v1198
        %v1315 = vsel %vm1238, %v1297, %v1200
        %v1317 = vsel %vm1238, %v1300, %v1202
        %v1319 = vsel %vm1238, %v1303, %v1204
        %v1321 = vsel %vm1255, %v1305, %v1206
        %v1324 = vsel %vm1255, %v1307, %v1208
        %v1327 = vsel %vm1255, %v1309, %v1210
        %v1330 = vsel %vm1255, %v1311, %v1212
        %v1333 = vsel %vm1255, %v1313, %v1214
        %v1336 = vsel %vm1255, %v1315, %v1216
        %v1339 = vsel %vm1255, %v1317, %v1218
        %v1342 = vsel %vm1255, %v1319, %v1220
        %v1344 = vld [vmem:[%s5] sm:$0xf]
        %v1345 = vld [vmem:[%s5 + $0x4] sm:$0xf]
        %v1346 = vld [vmem:[%s5 + $0x8] sm:$0xf]
        %v1347 = vld [vmem:[%s5 + $0xc] sm:$0xf]
        %v1348 = vld [vmem:[%s5 + $0x10] sm:$0xf]
        %v1349 = vld [vmem:[%s5 + $0x14] sm:$0xf]
        %v1350 = vld [vmem:[%s5 + $0x18] sm:$0xf]
        %v1351 = vld [vmem:[%s5 + $0x1c] sm:$0xf]
        %v1352 = vld [vmem:[%s5 + $0x20] sm:$0xf]
        %v1353 = vld [vmem:[%s5 + $0x24] sm:$0xf]
        %v1354 = vld [vmem:[%s5 + $0x28] sm:$0xf]
        %v1355 = vld [vmem:[%s5 + $0x2c] sm:$0xf]
        %v1356 = vld [vmem:[%s5 + $0x30] sm:$0xf]
        %v1357 = vld [vmem:[%s5 + $0x34] sm:$0xf]
        %v1358 = vld [vmem:[%s5 + $0x38] sm:$0xf]
        %v1359 = vld [vmem:[%s5 + $0x3c] sm:$0xf]
        %v1360 = vld [vmem:[%s5 + $0x40] sm:$0xf]
        %v1361 = vld [vmem:[%s5 + $0x44] sm:$0xf]
        %v1362 = vld [vmem:[%s5 + $0x48] sm:$0xf]
        %v1363 = vld [vmem:[%s5 + $0x4c] sm:$0xf]
        %v1364 = vld [vmem:[%s5 + $0x50] sm:$0xf]
        %v1365 = vld [vmem:[%s5 + $0x54] sm:$0xf]
        %v1366 = vld [vmem:[%s5 + $0x58] sm:$0xf]
        %v1367 = vld [vmem:[%s5 + $0x5c] sm:$0xf]
        %v1368 = vld [vmem:[%s5 + $0x60] sm:$0xf]
        %v1369 = vld [vmem:[%s5 + $0x64] sm:$0xf]
        %v1370 = vld [vmem:[%s5 + $0x68] sm:$0xf]
        %v1371 = vld [vmem:[%s5 + $0x6c] sm:$0xf]
        %v1372 = vld [vmem:[%s5 + $0x70] sm:$0xf]
        %v1373 = vld [vmem:[%s5 + $0x74] sm:$0xf]
        %v1374 = vld [vmem:[%s5 + $0x78] sm:$0xf]
        %v1375 = vld [vmem:[%s5 + $0x7c] sm:$0xf]
        %v1376 = vld [vmem:[%s5 + $0x80] sm:$0xf]
        %v1377 = vld [vmem:[%s5 + $0x84] sm:$0xf]
        %v1378 = vld [vmem:[%s5 + $0x88] sm:$0xf]
        %v1379 = vld [vmem:[%s5 + $0x8c] sm:$0xf]
        %v1416 = vunpack.c.l.b16 %v1344
        %v1417 = vunpack.c.l.b16 %v1345
        %v1418 = vunpack.c.l.b16 %v1346
        %v1419 = vunpack.c.l.b16 %v1347
        %v1420 = vunpack.c.l.b16 %v1348
        %v1421 = vunpack.c.l.b16 %v1349
        %v1422 = vunpack.c.l.b16 %v1350
        %v1423 = vunpack.c.l.b16 %v1351
        %v1424 = vunpack.c.l.b16 %v1352
        %v1425 = vunpack.c.l.b16 %v1353
        %v1426 = vunpack.c.l.b16 %v1354
        %v1427 = vunpack.c.l.b16 %v1355
        %v1428 = vunpack.c.l.b16 %v1356
        %v1429 = vunpack.c.l.b16 %v1357
        %v1430 = vunpack.c.l.b16 %v1358
        %v1431 = vunpack.c.l.b16 %v1359
        %v1432 = vunpack.c.l.b16 %v1360
        %v1433 = vunpack.c.l.b16 %v1361
        %v1434 = vunpack.c.l.b16 %v1362
        %v1435 = vunpack.c.l.b16 %v1363
        %v1436 = vunpack.c.l.b16 %v1364
        %v1437 = vunpack.c.l.b16 %v1365
        %v1438 = vunpack.c.l.b16 %v1366
        %v1439 = vunpack.c.l.b16 %v1367
        %v1440 = vunpack.c.l.b16 %v1368
        %v1441 = vunpack.c.l.b16 %v1369
        %v1442 = vunpack.c.l.b16 %v1370
        %v1443 = vunpack.c.l.b16 %v1371
        %v1444 = vunpack.c.l.b16 %v1372
        %v1445 = vunpack.c.l.b16 %v1373
        %v1446 = vunpack.c.l.b16 %v1374
        %v1447 = vunpack.c.l.b16 %v1375
        %v1448 = vunpack.c.l.b16 %v1376
        %v1449 = vunpack.c.l.b16 %v1377
        %v1450 = vunpack.c.l.b16 %v1378
        %v1451 = vunpack.c.l.b16 %v1379
        %v1452 = vpack.c.b16 %v1417, %v1416
        %v1453 = vpack.c.b16 %v1419, %v1418
        %v1454 = vpack.c.b16 %v1421, %v1420
        %v1455 = vpack.c.b16 %v1423, %v1422
        %v1456 = vpack.c.b16 %v1425, %v1424
        %v1457 = vpack.c.b16 %v1427, %v1426
        %v1458 = vpack.c.b16 %v1429, %v1428
        %v1459 = vpack.c.b16 %v1431, %v1430
        %v1460 = vpack.c.b16 %v1433, %v1432
        %v1461 = vpack.c.b16 %v1435, %v1434
        %v1462 = vpack.c.b16 %v1437, %v1436
        %v1463 = vpack.c.b16 %v1439, %v1438
        %v1464 = vpack.c.b16 %v1441, %v1440
        %v1465 = vpack.c.b16 %v1443, %v1442
        %v1466 = vpack.c.b16 %v1445, %v1444
        %v1467 = vpack.c.b16 %v1447, %v1446
        %v1468 = vpack.c.b16 %v1449, %v1448
        %v1469 = vpack.c.b16 %v1451, %v1450
        %v1489 = vsel %vm1221, %v1075, 0
        %v1492 = vsel %vm1221, %v1078, 0
        %v1495 = vsel %vm1221, %v1081, 0
        %v1498 = vsel %vm1221, %v1084, 0
        %v1501 = vsel %vm1221, %v1087, 0
        %v1504 = vsel %vm1221, %v1090, 0
        %v1507 = vsel %vm1221, %v1107, 0
        %v1510 = vsel %vm1221, %v1124, 0
        %1512 = vmatprep.subr.bf16.mxu0 0
        %1513 = vmatpush1.bf16.msra.mxu0 %v1452
        %1514 = vmatprep.subr.bf16.mxu0 0
        %1515 = vmatpush1.bf16.msra.mxu0 %v1453
        %1516 = vmatprep.subr.bf16.mxu0 0
        %1517 = vmatpush1.bf16.msra.mxu0 %v1454
        %1518 = vmatprep.subr.bf16.mxu0 0
        %1519 = vmatpush1.bf16.msra.mxu0 %v1455
        %1520 = vmatprep.subr.bf16.mxu0 0
        %1521 = vmatpush1.bf16.msra.mxu0 %v1456
        %1522 = vmatprep.subr.bf16.mxu0 0
        %1523 = vmatpush1.bf16.msra.mxu0 %v1457
        %1524 = vmatprep.subr.bf16.mxu0 0
        %1525 = vmatpush1.bf16.msra.mxu0 %v1458
        %1526 = vmatprep.subr.bf16.mxu0 0
        %1527 = vmatpush1.bf16.msra.mxu0 %v1459
        %1528 = vmatprep.subr.bf16.mxu0 0
        %1529 = vmatpush1.bf16.msra.mxu0 %v1460
        %1530 = vmatprep.subr.bf16.mxu0 0
        %1531 = vmatpush1.bf16.msra.mxu0 %v1461
        %1532 = vmatprep.subr.bf16.mxu0 0
        %1533 = vmatpush1.bf16.msra.mxu0 %v1462
        %1534 = vmatprep.subr.bf16.mxu0 0
        %1535 = vmatpush1.bf16.msra.mxu0 %v1463
        %1536 = vmatprep.subr.bf16.mxu0 0
        %1537 = vmatpush1.bf16.msra.mxu0 %v1464
        %1538 = vmatprep.subr.bf16.mxu0 0
        %1539 = vmatpush1.bf16.msra.mxu0 %v1465
        %1540 = vmatprep.subr.bf16.mxu0 0
        %1541 = vmatpush1.bf16.msra.mxu0 %v1466
        %1542 = vmatprep.subr.bf16.mxu0 0
        %1543 = vmatpush1.bf16.msra.mxu0 %v1467
        %1544 = vmatprep.mubr.bf16.mxu0 %v1321
        %1545 = vmatmul.mubr.bf16.gmra.mrb[0].mxu0 %v1257
        %v1546 = vpop.f32.mrb[0].mxu0
        %v1547 = vadd.f32 0.0, %v1546
        %v1548 = vpop.f32.mrb[0].mxu0
        %v1549 = vpop.f32.mrb[0].mxu0
        %v1550 = vadd.f32 0.0, %v1549
        %v1551 = vpop.f32.mrb[0].mxu0
        %1552 = vmatprep.mubr.bf16.mxu0 %v1324
        %1553 = vmatmul.mubr.bf16.gmra.mrb[0].mxu0 %v1260
        %v1554 = vpop.f32.mrb[0].mxu0
        %v1555 = vadd.f32 0.0, %v1554
        %v1556 = vpop.f32.mrb[0].mxu0
        %v1557 = vpop.f32.mrb[0].mxu0
        %v1558 = vadd.f32 0.0, %v1557
        %v1559 = vpop.f32.mrb[0].mxu0
        %1560 = vmatprep.mubr.bf16.mxu0 %v1327
        %1561 = vmatmul.mubr.bf16.gmra.mrb[0].mxu0 %v1263
        %v1562 = vpop.f32.mrb[0].mxu0
        %v1563 = vadd.f32 0.0, %v1562
        %v1564 = vpop.f32.mrb[0].mxu0
        %v1565 = vpop.f32.mrb[0].mxu0
        %v1566 = vadd.f32 0.0, %v1565
        %v1567 = vpop.f32.mrb[0].mxu0
        %1568 = vmatprep.mubr.bf16.mxu0 %v1330
        %1569 = vmatmul.mubr.bf16.gmra.mrb[0].mxu0 %v1266
        %v1570 = vpop.f32.mrb[0].mxu0
        %v1571 = vadd.f32 0.0, %v1570
        %v1572 = vpop.f32.mrb[0].mxu0
        %v1573 = vpop.f32.mrb[0].mxu0
        %v1574 = vadd.f32 0.0, %v1573
        %v1575 = vpop.f32.mrb[0].mxu0
        %1576 = vmatprep.mubr.bf16.mxu0 %v1333
        %1577 = vmatmul.mubr.bf16.gmra.mrb[0].mxu0 %v1269
        %v1578 = vpop.f32.mrb[0].mxu0
        %v1579 = vadd.f32 0.0, %v1578
        %v1580 = vpop.f32.mrb[0].mxu0
        %v1581 = vpop.f32.mrb[0].mxu0
        %v1582 = vadd.f32 0.0, %v1581
        %v1583 = vpop.f32.mrb[0].mxu0
        %1584 = vmatprep.mubr.bf16.mxu0 %v1336
        %1585 = vmatmul.mubr.bf16.gmra.mrb[0].mxu0 %v1272
        %v1586 = vpop.f32.mrb[0].mxu0
        %v1587 = vadd.f32 0.0, %v1586
        %v1588 = vpop.f32.mrb[0].mxu0
        %v1589 = vpop.f32.mrb[0].mxu0
        %v1590 = vadd.f32 0.0, %v1589
        %v1591 = vpop.f32.mrb[0].mxu0
        %1592 = vmatprep.mubr.bf16.mxu0 %v1339
        %1593 = vmatmul.mubr.bf16.gmra.mrb[0].mxu0 %v1275
        %v1594 = vpop.f32.mrb[0].mxu0
        %v1595 = vadd.f32 0.0, %v1594
        %v1596 = vpop.f32.mrb[0].mxu0
        %v1597 = vpop.f32.mrb[0].mxu0
        %v1598 = vadd.f32 0.0, %v1597
        %v1599 = vpop.f32.mrb[0].mxu0
        %1600 = vmatprep.mubr.bf16.mxu0 %v1342
        %1601 = vmatmul.mubr.bf16.gmra.mrb[0].mxu0 %v1278
        %v1602 = vpop.f32.mrb[0].mxu0
        %v1603 = vadd.f32 0.0, %v1602
        %v1604 = vpop.f32.mrb[0].mxu0
        %v1605 = vpop.f32.mrb[0].mxu0
        %v1606 = vadd.f32 0.0, %v1605
        %v1607 = vpop.f32.mrb[0].mxu0
        %1608 = vdwg.mxu0
        %1609 = vmatprep.subr.bf16.mxu0 0
        %1610 = vmatpush1.bf16.msra.mxu0 %v1468
        %1611 = vmatprep.subr.bf16.mxu0 0
        %1612 = vmatpush1.bf16.msra.mxu0 %v1469
        %1613 = vmatprep.subr.bf16.mxu0 0
        %1614 = vmatpush1.bf16.msra.mxu0 0
        %1615 = vmatprep.subr.bf16.mxu0 0
        %1616 = vmatpush1.bf16.msra.mxu0 0
        %1617 = vmatprep.subr.bf16.mxu0 0
        %1618 = vmatpush1.bf16.msra.mxu0 0
        %1619 = vmatprep.subr.bf16.mxu0 0
        %1620 = vmatpush1.bf16.msra.mxu0 0
        %1621 = vmatprep.subr.bf16.mxu0 0
        %1622 = vmatpush1.bf16.msra.mxu0 0
        %1623 = vmatprep.subr.bf16.mxu0 0
        %1624 = vmatpush1.bf16.msra.mxu0 0
        %1625 = vmatprep.subr.bf16.mxu0 0
        %1626 = vmatpush1.bf16.msra.mxu0 0
        %1627 = vmatprep.subr.bf16.mxu0 0
        %1628 = vmatpush1.bf16.msra.mxu0 0
        %1629 = vmatprep.subr.bf16.mxu0 0
        %1630 = vmatpush1.bf16.msra.mxu0 0
        %1631 = vmatprep.subr.bf16.mxu0 0
        %1632 = vmatpush1.bf16.msra.mxu0 0
        %1633 = vmatprep.subr.bf16.mxu0 0
        %1634 = vmatpush1.bf16.msra.mxu0 0
        %1635 = vmatprep.subr.bf16.mxu0 0
        %1636 = vmatpush1.bf16.msra.mxu0 0
        %1637 = vmatprep.subr.bf16.mxu0 0
        %1638 = vmatpush1.bf16.msra.mxu0 0
        %1639 = vmatprep.subr.bf16.mxu0 0
        %1640 = vmatpush1.bf16.msra.mxu0 0
        %1641 = vmatprep.mubr.bf16.mxu0 0
        %1642 = vmatmul.mubr.bf16.gmra.mrb[0].mxu0 %v1489
        %v1643 = vpop.f32.mrb[0].mxu0
        %v1644 = vadd.f32 %v1547, %v1643
        %v1645 = vpop.f32.mrb[0].mxu0
        %v1646 = vpop.f32.mrb[0].mxu0
        %v1647 = vadd.f32 %v1550, %v1646
        %v1648 = vpop.f32.mrb[0].mxu0
        %1649 = vmatprep.mubr.bf16.mxu0 0
        %1650 = vmatmul.mubr.bf16.gmra.mrb[0].mxu0 %v1492
        %v1651 = vpop.f32.mrb[0].mxu0
        %v1652 = vadd.f32 %v1555, %v1651
        %v1653 = vpop.f32.mrb[0].mxu0
        %v1654 = vpop.f32.mrb[0].mxu0
        %v1655 = vadd.f32 %v1558, %v1654
        %v1656 = vpop.f32.mrb[0].mxu0
        %1657 = vmatprep.mubr.bf16.mxu0 0
        %1658 = vmatmul.mubr.bf16.gmra.mrb[0].mxu0 %v1495
        %v1659 = vpop.f32.mrb[0].mxu0
        %v1660 = vadd.f32 %v1563, %v1659
        %v1661 = vpop.f32.mrb[0].mxu0
        %v1662 = vpop.f32.mrb[0].mxu0
        %v1663 = vadd.f32 %v1566, %v1662
        %v1664 = vpop.f32.mrb[0].mxu0
        %1665 = vmatprep.mubr.bf16.mxu0 0
        %1666 = vmatmul.mubr.bf16.gmra.mrb[0].mxu0 %v1498
        %v1667 = vpop.f32.mrb[0].mxu0
        %v1668 = vadd.f32 %v1571, %v1667
        %v1669 = vpop.f32.mrb[0].mxu0
        %v1670 = vpop.f32.mrb[0].mxu0
        %v1671 = vadd.f32 %v1574, %v1670
        %v1672 = vpop.f32.mrb[0].mxu0
        %1673 = vmatprep.mubr.bf16.mxu0 0
        %1674 = vmatmul.mubr.bf16.gmra.mrb[0].mxu0 %v1501
        %v1675 = vpop.f32.mrb[0].mxu0
        %v1676 = vadd.f32 %v1579, %v1675
        %v1677 = vpop.f32.mrb[0].mxu0
        %v1678 = vpop.f32.mrb[0].mxu0
        %v1679 = vadd.f32 %v1582, %v1678
        %v1680 = vpop.f32.mrb[0].mxu0
        %1681 = vmatprep.mubr.bf16.mxu0 0
        %1682 = vmatmul.mubr.bf16.gmra.mrb[0].mxu0 %v1504
        %v1683 = vpop.f32.mrb[0].mxu0
        %v1684 = vadd.f32 %v1587, %v1683
        %v1685 = vpop.f32.mrb[0].mxu0
        %v1686 = vpop.f32.mrb[0].mxu0
        %v1687 = vadd.f32 %v1590, %v1686
        %v1688 = vpop.f32.mrb[0].mxu0
        %1689 = vmatprep.mubr.bf16.mxu0 0
        %1690 = vmatmul.mubr.bf16.gmra.mrb[0].mxu0 %v1507
        %v1691 = vpop.f32.mrb[0].mxu0
        %v1692 = vadd.f32 %v1595, %v1691
        %v1693 = vpop.f32.mrb[0].mxu0
        %v1694 = vpop.f32.mrb[0].mxu0
        %v1695 = vadd.f32 %v1598, %v1694
        %v1696 = vpop.f32.mrb[0].mxu0
        %1697 = vmatprep.mubr.bf16.mxu0 0
        %1698 = vmatmul.mubr.bf16.gmra.mrb[0].mxu0 %v1510
        %v1699 = vpop.f32.mrb[0].mxu0
        %v1700 = vadd.f32 %v1603, %v1699
        %v1701 = vpop.f32.mrb[0].mxu0
        %v1702 = vpop.f32.mrb[0].mxu0
        %v1703 = vadd.f32 %v1606, %v1702
        %v1704 = vpop.f32.mrb[0].mxu0
        %1705 = vdwg.mxu0
        %v1706 = vld [vmem:[%s6] sm:$0x1]
        %v1708 = vlaneseq
        %v1709 = vshrl.u32 %v1708, 7
        %v1710 = vsub.s32 0, %v1709
        %v1711 = vrot.slane %v1706, %v1710
        %v1713 = vmul.f32 %v1644, %v1711
        %v1714 = vmul.f32 %v1647, %v1711
        %v1715 = vmul.f32 %v1652, %v1711
        %v1716 = vmul.f32 %v1655, %v1711
        %v1717 = vmul.f32 %v1660, %v1711
        %v1718 = vmul.f32 %v1663, %v1711
        %v1719 = vmul.f32 %v1668, %v1711
        %v1720 = vmul.f32 %v1671, %v1711
        %v1721 = vmul.f32 %v1676, %v1711
        %v1722 = vmul.f32 %v1679, %v1711
        %v1723 = vmul.f32 %v1684, %v1711
        %v1724 = vmul.f32 %v1687, %v1711
        %v1725 = vmul.f32 %v1692, %v1711
        %v1726 = vmul.f32 %v1695, %v1711
        %v1727 = vmul.f32 %v1700, %v1711
        %v1728 = vmul.f32 %v1703, %v1711
        %v1729 = vld [vmem:[%s7] sm:$0x1]
        %v1731 = vlaneseq
        %v1732 = vshrl.u32 %v1731, 7
        %v1733 = vsub.s32 0, %v1732
        %v1734 = vrot.slane %v1729, %v1733
        %v1736 = vadd.f32 %v1713, %v1734
        %v1737 = vadd.f32 %v1714, %v1734
        %v1738 = vadd.f32 %v1715, %v1734
        %v1739 = vadd.f32 %v1716, %v1734
        %v1740 = vadd.f32 %v1717, %v1734
        %v1741 = vadd.f32 %v1718, %v1734
        %v1742 = vadd.f32 %v1719, %v1734
        %v1743 = vadd.f32 %v1720, %v1734
        %v1744 = vadd.f32 %v1721, %v1734
        %v1745 = vadd.f32 %v1722, %v1734
        %v1746 = vadd.f32 %v1723, %v1734
        %v1747 = vadd.f32 %v1724, %v1734
        %v1748 = vadd.f32 %v1725, %v1734
        %v1749 = vadd.f32 %v1726, %v1734
        %v1750 = vadd.f32 %v1727, %v1734
        %v1751 = vadd.f32 %v1728, %v1734
        %v1752 = vmax.f32 %v1736, 0.0
        %v1753 = vmax.f32 %v1737, 0.0
        %v1754 = vmax.f32 %v1738, 0.0
        %v1755 = vmax.f32 %v1739, 0.0
        %v1756 = vmax.f32 %v1740, 0.0
        %v1757 = vmax.f32 %v1741, 0.0
        %v1758 = vmax.f32 %v1742, 0.0
        %v1759 = vmax.f32 %v1743, 0.0
        %v1760 = vmax.f32 %v1744, 0.0
        %v1761 = vmax.f32 %v1745, 0.0
        %v1762 = vmax.f32 %v1746, 0.0
        %v1763 = vmax.f32 %v1747, 0.0
        %v1764 = vmax.f32 %v1748, 0.0
        %v1765 = vmax.f32 %v1749, 0.0
        %v1766 = vmax.f32 %v1750, 0.0
        %v1767 = vmax.f32 %v1751, 0.0
        %v1768 = vpack.c.bf16 %v1753, %v1752
        %v1769 = vpack.c.bf16 %v1755, %v1754
        %v1770 = vpack.c.bf16 %v1757, %v1756
        %v1771 = vpack.c.bf16 %v1759, %v1758
        %v1772 = vpack.c.bf16 %v1761, %v1760
        %v1773 = vpack.c.bf16 %v1763, %v1762
        %v1774 = vpack.c.bf16 %v1765, %v1764
        %v1775 = vpack.c.bf16 %v1767, %v1766
        %v1776 = vld [vmem:[%s8] sm:$0xf]
        %v1777 = vld [vmem:[%s8 + $0x4] sm:$0xf]
        %v1778 = vld [vmem:[%s8 + $0x8] sm:$0xf]
        %v1779 = vld [vmem:[%s8 + $0xc] sm:$0xf]
        %v1784 = vunpack.c.l.b16 %v1776
        %v1785 = vunpack.c.l.b16 %v1777
        %v1786 = vunpack.c.l.b16 %v1778
        %v1787 = vunpack.c.l.b16 %v1779
        %v1788 = vpack.c.b16 %v1785, %v1784
        %v1789 = vpack.c.b16 %v1787, %v1786
        %v1793 = vsel %vm1221, %v1768, 0
        %v1796 = vsel %vm1221, %v1769, 0
        %v1799 = vsel %vm1221, %v1770, 0
        %v1802 = vsel %vm1221, %v1771, 0
        %v1805 = vsel %vm1221, %v1772, 0
        %v1808 = vsel %vm1221, %v1773, 0
        %v1811 = vsel %vm1221, %v1774, 0
        %v1814 = vsel %vm1221, %v1775, 0
        %1816 = vmatprep.subr.bf16.mxu0 0
        %1817 = vmatpush1.bf16.msra.mxu0 %v1788
        %1818 = vmatprep.subr.bf16.mxu0 0
        %1819 = vmatpush1.bf16.msra.mxu0 %v1789
        %1820 = vmatprep.subr.bf16.mxu0 0
        %1821 = vmatpush1.bf16.msra.mxu0 0
        %1822 = vmatprep.subr.bf16.mxu0 0
        %1823 = vmatpush1.bf16.msra.mxu0 0
        %1824 = vmatprep.subr.bf16.mxu0 0
        %1825 = vmatpush1.bf16.msra.mxu0 0
        %1826 = vmatprep.subr.bf16.mxu0 0
        %1827 = vmatpush1.bf16.msra.mxu0 0
        %1828 = vmatprep.subr.bf16.mxu0 0
        %1829 = vmatpush1.bf16.msra.mxu0 0
        %1830 = vmatprep.subr.bf16.mxu0 0
        %1831 = vmatpush1.bf16.msra.mxu0 0
        %1832 = vmatprep.subr.bf16.mxu0 0
        %1833 = vmatpush1.bf16.msra.mxu0 0
        %1834 = vmatprep.subr.bf16.mxu0 0
        %1835 = vmatpush1.bf16.msra.mxu0 0
        %1836 = vmatprep.subr.bf16.mxu0 0
        %1837 = vmatpush1.bf16.msra.mxu0 0
        %1838 = vmatprep.subr.bf16.mxu0 0
        %1839 = vmatpush1.bf16.msra.mxu0 0
        %1840 = vmatprep.subr.bf16.mxu0 0
        %1841 = vmatpush1.bf16.msra.mxu0 0
        %1842 = vmatprep.subr.bf16.mxu0 0
        %1843 = vmatpush1.bf16.msra.mxu0 0
        %1844 = vmatprep.subr.bf16.mxu0 0
        %1845 = vmatpush1.bf16.msra.mxu0 0
        %1846 = vmatprep.subr.bf16.mxu0 0
        %1847 = vmatpush1.bf16.msra.mxu0 0
        %1848 = vmatprep.mubr.bf16.mxu0 0
        %1849 = vmatmul.mubr.bf16.gmra.mrb[0].mxu0 %v1793
        %v1850 = vpop.f32.mrb[0].mxu0
        %v1851 = vadd.f32 0.0, %v1850
        %v1852 = vpop.f32.mrb[0].mxu0
        %v1853 = vpop.f32.mrb[0].mxu0
        %v1854 = vadd.f32 0.0, %v1853
        %v1855 = vpop.f32.mrb[0].mxu0
        %1856 = vmatprep.mubr.bf16.mxu0 0
        %1857 = vmatmul.mubr.bf16.gmra.mrb[0].mxu0 %v1796
        %v1858 = vpop.f32.mrb[0].mxu0
        %v1859 = vadd.f32 0.0, %v1858
        %v1860 = vpop.f32.mrb[0].mxu0
        %v1861 = vpop.f32.mrb[0].mxu0
        %v1862 = vadd.f32 0.0, %v1861
        %v1863 = vpop.f32.mrb[0].mxu0
        %1864 = vmatprep.mubr.bf16.mxu0 0
        %1865 = vmatmul.mubr.bf16.gmra.mrb[0].mxu0 %v1799
        %v1866 = vpop.f32.mrb[0].mxu0
        %v1867 = vadd.f32 0.0, %v1866
        %v1868 = vpop.f32.mrb[0].mxu0
        %v1869 = vpop.f32.mrb[0].mxu0
        %v1870 = vadd.f32 0.0, %v1869
        %v1871 = vpop.f32.mrb[0].mxu0
        %1872 = vmatprep.mubr.bf16.mxu0 0
        %1873 = vmatmul.mubr.bf16.gmra.mrb[0].mxu0 %v1802
        %v1874 = vpop.f32.mrb[0].mxu0
        %v1875 = vadd.f32 0.0, %v1874
        %v1876 = vpop.f32.mrb[0].mxu0
        %v1877 = vpop.f32.mrb[0].mxu0
        %v1878 = vadd.f32 0.0, %v1877
        %v1879 = vpop.f32.mrb[0].mxu0
        %1880 = vmatprep.mubr.bf16.mxu0 0
        %1881 = vmatmul.mubr.bf16.gmra.mrb[0].mxu0 %v1805
        %v1882 = vpop.f32.mrb[0].mxu0
        %v1883 = vadd.f32 0.0, %v1882
        %v1884 = vpop.f32.mrb[0].mxu0
        %v1885 = vpop.f32.mrb[0].mxu0
        %v1886 = vadd.f32 0.0, %v1885
        %v1887 = vpop.f32.mrb[0].mxu0
        %1888 = vmatprep.mubr.bf16.mxu0 0
        %1889 = vmatmul.mubr.bf16.gmra.mrb[0].mxu0 %v1808
        %v1890 = vpop.f32.mrb[0].mxu0
        %v1891 = vadd.f32 0.0, %v1890
        %v1892 = vpop.f32.mrb[0].mxu0
        %v1893 = vpop.f32.mrb[0].mxu0
        %v1894 = vadd.f32 0.0, %v1893
        %v1895 = vpop.f32.mrb[0].mxu0
        %1896 = vmatprep.mubr.bf16.mxu0 0
        %1897 = vmatmul.mubr.bf16.gmra.mrb[0].mxu0 %v1811
        %v1898 = vpop.f32.mrb[0].mxu0
        %v1899 = vadd.f32 0.0, %v1898
        %v1900 = vpop.f32.mrb[0].mxu0
        %v1901 = vpop.f32.mrb[0].mxu0
        %v1902 = vadd.f32 0.0, %v1901
        %v1903 = vpop.f32.mrb[0].mxu0
        %1904 = vmatprep.mubr.bf16.mxu0 0
        %1905 = vmatmul.mubr.bf16.gmra.mrb[0].mxu0 %v1814
        %v1906 = vpop.f32.mrb[0].mxu0
        %v1907 = vadd.f32 0.0, %v1906
        %v1908 = vpop.f32.mrb[0].mxu0
        %v1909 = vpop.f32.mrb[0].mxu0
        %v1910 = vadd.f32 0.0, %v1909
        %v1911 = vpop.f32.mrb[0].mxu0
        %1912 = vdwg.mxu0
        %v1913 = vld [vmem:[%s9] sm:$0x1]
        %v1915 = vlaneseq
        %v1916 = vshrl.u32 %v1915, 7
        %v1917 = vsub.s32 0, %v1916
        %v1918 = vrot.slane %v1913, %v1917
        %v1920 = vmul.f32 %v1851, %v1918
        %v1921 = vmul.f32 %v1854, %v1918
        %v1922 = vmul.f32 %v1859, %v1918
        %v1923 = vmul.f32 %v1862, %v1918
        %v1924 = vmul.f32 %v1867, %v1918
        %v1925 = vmul.f32 %v1870, %v1918
        %v1926 = vmul.f32 %v1875, %v1918
        %v1927 = vmul.f32 %v1878, %v1918
        %v1928 = vmul.f32 %v1883, %v1918
        %v1929 = vmul.f32 %v1886, %v1918
        %v1930 = vmul.f32 %v1891, %v1918
        %v1931 = vmul.f32 %v1894, %v1918
        %v1932 = vmul.f32 %v1899, %v1918
        %v1933 = vmul.f32 %v1902, %v1918
        %v1934 = vmul.f32 %v1907, %v1918
        %v1935 = vmul.f32 %v1910, %v1918
        %v1936 = vld [vmem:[%s10] sm:$0x1]
        %v1938 = vlaneseq
        %v1939 = vshrl.u32 %v1938, 7
        %v1940 = vsub.s32 0, %v1939
        %v1941 = vrot.slane %v1936, %v1940
        %v1943 = vadd.f32 %v1920, %v1941
        %v1944 = vadd.f32 %v1921, %v1941
        %v1945 = vadd.f32 %v1922, %v1941
        %v1946 = vadd.f32 %v1923, %v1941
        %v1947 = vadd.f32 %v1924, %v1941
        %v1948 = vadd.f32 %v1925, %v1941
        %v1949 = vadd.f32 %v1926, %v1941
        %v1950 = vadd.f32 %v1927, %v1941
        %v1951 = vadd.f32 %v1928, %v1941
        %v1952 = vadd.f32 %v1929, %v1941
        %v1953 = vadd.f32 %v1930, %v1941
        %v1954 = vadd.f32 %v1931, %v1941
        %v1955 = vadd.f32 %v1932, %v1941
        %v1956 = vadd.f32 %v1933, %v1941
        %v1957 = vadd.f32 %v1934, %v1941
        %v1958 = vadd.f32 %v1935, %v1941
        %v1959 = vld [vmem:[%s404] sm:$0xf]
        %v1960 = vld [vmem:[%s404 + $0x4] sm:$0xf]
        %v1961 = vld [vmem:[%s404 + $0x8] sm:$0xf]
        %v1962 = vld [vmem:[%s404 + $0xc] sm:$0xf]
        %v1963 = vld [vmem:[%s404 + $0x10] sm:$0xf]
        %v1964 = vld [vmem:[%s404 + $0x14] sm:$0xf]
        %v1965 = vld [vmem:[%s404 + $0x18] sm:$0xf]
        %v1966 = vld [vmem:[%s404 + $0x1c] sm:$0xf]
        %v1967 = vld [vmem:[%s404 + $0x20] sm:$0xf]
        %v1968 = vld [vmem:[%s404 + $0x24] sm:$0xf]
        %v1969 = vld [vmem:[%s404 + $0x28] sm:$0xf]
        %v1970 = vld [vmem:[%s404 + $0x2c] sm:$0xf]
        %v1971 = vld [vmem:[%s404 + $0x30] sm:$0xf]
        %v1972 = vld [vmem:[%s404 + $0x34] sm:$0xf]
        %v1973 = vld [vmem:[%s404 + $0x38] sm:$0xf]
        %v1974 = vld [vmem:[%s404 + $0x3c] sm:$0xf]
        %v1975 = vunpack.c.l.bf16 %v1959
        %v1976 = vunpack.c.l.bf16 %v1960
        %v1977 = vunpack.c.l.bf16 %v1961
        %v1978 = vunpack.c.l.bf16 %v1962
        %v1979 = vunpack.c.l.bf16 %v1963
        %v1980 = vunpack.c.l.bf16 %v1964
        %v1981 = vunpack.c.l.bf16 %v1965
        %v1982 = vunpack.c.l.bf16 %v1966
        %v1983 = vunpack.c.l.bf16 %v1967
        %v1984 = vunpack.c.l.bf16 %v1968
        %v1985 = vunpack.c.l.bf16 %v1969
        %v1986 = vunpack.c.l.bf16 %v1970
        %v1987 = vunpack.c.l.bf16 %v1971
        %v1988 = vunpack.c.l.bf16 %v1972
        %v1989 = vunpack.c.l.bf16 %v1973
        %v1990 = vunpack.c.l.bf16 %v1974
        %v1991 = vadd.f32 %v1943, %v1975
        %v1992 = vadd.f32 %v1944, %v1976
        %v1993 = vadd.f32 %v1945, %v1977
        %v1994 = vadd.f32 %v1946, %v1978
        %v1995 = vadd.f32 %v1947, %v1979
        %v1996 = vadd.f32 %v1948, %v1980
        %v1997 = vadd.f32 %v1949, %v1981
        %v1998 = vadd.f32 %v1950, %v1982
        %v1999 = vadd.f32 %v1951, %v1983
        %v2000 = vadd.f32 %v1952, %v1984
        %v2001 = vadd.f32 %v1953, %v1985
        %v2002 = vadd.f32 %v1954, %v1986
        %v2003 = vadd.f32 %v1955, %v1987
        %v2004 = vadd.f32 %v1956, %v1988
        %v2005 = vadd.f32 %v1957, %v1989
        %v2006 = vadd.f32 %v1958, %v1990
        %v2007 = vmax.f32 %v1991, 0.0
        %v2008 = vmax.f32 %v1992, 0.0
        %v2009 = vmax.f32 %v1993, 0.0
        %v2010 = vmax.f32 %v1994, 0.0
        %v2011 = vmax.f32 %v1995, 0.0
        %v2012 = vmax.f32 %v1996, 0.0
        %v2013 = vmax.f32 %v1997, 0.0
        %v2014 = vmax.f32 %v1998, 0.0
        %v2015 = vmax.f32 %v1999, 0.0
        %v2016 = vmax.f32 %v2000, 0.0
        %v2017 = vmax.f32 %v2001, 0.0
        %v2018 = vmax.f32 %v2002, 0.0
        %v2019 = vmax.f32 %v2003, 0.0
        %v2020 = vmax.f32 %v2004, 0.0
        %v2021 = vmax.f32 %v2005, 0.0
        %v2022 = vmax.f32 %v2006, 0.0
        %2023 = vst [vmem:[%s394] sm:$0xff] %v2007
        %2024 = vst [vmem:[%s394 + $0x8] sm:$0xff] %v2008
        %2025 = vst [vmem:[%s394 + $0x10] sm:$0xff] %v2009
        %2026 = vst [vmem:[%s394 + $0x18] sm:$0xff] %v2010
        %2027 = vst [vmem:[%s394 + $0x20] sm:$0xff] %v2011
        %2028 = vst [vmem:[%s394 + $0x28] sm:$0xff] %v2012
        %2029 = vst [vmem:[%s394 + $0x30] sm:$0xff] %v2013
        %2030 = vst [vmem:[%s394 + $0x38] sm:$0xff] %v2014
        %2031 = vst [vmem:[%s394 + $0x40] sm:$0xff] %v2015
        %2032 = vst [vmem:[%s394 + $0x48] sm:$0xff] %v2016
        %2033 = vst [vmem:[%s394 + $0x50] sm:$0xff] %v2017
        %2034 = vst [vmem:[%s394 + $0x58] sm:$0xff] %v2018
        %2035 = vst [vmem:[%s394 + $0x60] sm:$0xff] %v2019
        %2036 = vst [vmem:[%s394 + $0x68] sm:$0xff] %v2020
        %2037 = vst [vmem:[%s394 + $0x70] sm:$0xff] %v2021
        %2038 = vst [vmem:[%s394 + $0x78] sm:$0xff] %v2022
        %s2039 = sand.u32 %s274, 1
        %s2040 = scalar_lea.sflag [#allocation3], %s2039
        %s2041 = sand.u32 %s274, 1
        %s2042 = smul.addr %s2041, 128
        %s2043 = scalar_lea.vmem [#allocation2], %s2042
        // Predicated region
        $region65: #{bottleneck_forward.1} parent=63 // pred_check
          %p2044 = pneg %p284
        $region66: #{bottleneck_forward.1} parent=63 // pred_check_branch
          %2046 = sbr.rel (%p2044) target = $region68
        $region67: #{bottleneck_forward.1} parent=63 // pred_region
          %s2048 = ssub.s32 2048, 2048
          %2049 = vsyncadd %s2040, %s2048
          %s2050 = smul.addr %s25, 16
          %s2051 = smul.addr %s2050, 128
          %s2052 = scalar_lea.hbm %s11, %s2051
          %s2053 = sshll.u32 %s2043, 4
          %s2054 = int_to_ptr.vmem [resolvable:$true] %s2053
          %2059 = dma.vmem_to_hbm [thread:$0]  %s2054, 2048, %s2052, %s2040, 128, 128, 8
        $region68: #{bottleneck_forward.1} parent=63 // pred_fallthru
          _
      $region64: #{bottleneck_forward.1} parent=5 // pred_fallthru
        _
      %p2060 = scmp.le.s32.totalorder 2, %s20
      // Predicated region
      $region69: #{bottleneck_forward.1} parent=5 // pred_check
        %p2061 = pneg %p2060
      $region70: #{bottleneck_forward.1} parent=5 // pred_check_branch
        %2063 = sbr.rel (%p2061) target = $region72
      $region71: #{bottleneck_forward.1} parent=5 // pred_region
        %s2064 = ssub.s32 %s20, 2
        // Predicated region
        $region73: #{bottleneck_forward.1} parent=71 // pred_check
          %p2065 = pneg %p290
        $region74: #{bottleneck_forward.1} parent=71 // pred_check_branch
          %2067 = sbr.rel (%p2065) target = $region76
        $region75: #{bottleneck_forward.1} parent=71 // pred_region
          %s2068 = sand.u32 %s275, 1
          %s2069 = scalar_lea.sflag [#allocation3], %s2068
          %s2070 = sand.u32 %s275, 1
          %s2071 = smul.addr %s2070, 128
          %s2072 = scalar_lea.vmem [#allocation2], %s2071
          %2073 = dma.done %s2069, 2048
        $region76: #{bottleneck_forward.1} parent=71 // pred_fallthru
          _
      $region72: #{bottleneck_forward.1} parent=5 // pred_fallthru
        _
    $region6: #{bottleneck_forward.1} parent=1 // loop_footer
      %s24 = sadd.s32 1, %s20
    $region7: #{bottleneck_forward.1} parent=1 // loop_footer_branch
      %19 = sbr.rel target = $region3
    $region8: #{bottleneck_forward.1} parent=1 // loop_exit
      _
    %2074 = vsyncpa [#allocation3], 1
    %s2075 = scalar_lea.sflag [#allocation3], 1
    %2076 = vsyncpa %s2075, 1

</llo_original>
